<compile_context>
chip_gen: v7x
topology: tpu7x:2x2x1
jax: 0.10.0
libtpu: 0.0.40
codegen_flags: <defaults>
</compile_context>

<pallas_src>
import functools

import jax
import jax.numpy as jnp
from jax.experimental import pallas as pl
from jax.experimental.pallas import tpu as pltpu


# -----------------------------------------------------------------------------
# Kernel
# -----------------------------------------------------------------------------
def dsgc_kernel(x_ref, m_ref, g_hbm, f_ref, w1_ref, b1_ref, w2_ref, b2_ref,
                out_ref, g_vmem, h_ref, xd_ref, g_sem, *,
                alpha, inv_keep, n_pad, tile_m):
    t = pl.program_id(0)          # propagation step (outer, strictly sequential)
    i = pl.program_id(1)          # output row tile
    n_t = pl.num_programs(0)

    ioff = pl.multiple_of(i * tile_m, tile_m)
    # h scratch layout: rows [0, n_pad) = slot 0, rows [n_pad, 2*n_pad) = slot 1.
    roff = pl.multiple_of((t % 2) * n_pad, tile_m)                      # read h_t
    woff = pl.multiple_of(((t + 1) % 2) * n_pad + i * tile_m, tile_m)   # write h_{t+1}

    # First grid step: bring G into VMEM once (single resident copy) and build
    # the dropped input xd = x * mask / keep (f32) and h_0 = xd (bf16).
    @pl.when((t == 0) & (i == 0))
    def _():
        g_copy = pltpu.make_async_copy(g_hbm, g_vmem, g_sem)
        g_copy.start()                                   # overlap with dropout prep
        xd = x_ref[...] * m_ref[...].astype(jnp.float32) * inv_keep
        xd_ref[...] = xd
        h_ref[pl.ds(0, n_pad), :] = xd.astype(jnp.bfloat16)
        g_copy.wait()

    # Propagation: a single (tile_m, Np) x (Np, Dp) bf16 matmul on the MXU per
    # grid step (k axis collapsed), accumulated in f32.
    gh = jnp.dot(g_vmem[pl.ds(ioff, tile_m), :],
                 h_ref[pl.ds(roff, n_pad), :],
                 preferred_element_type=jnp.float32)
    h_new = (1.0 - alpha) * gh + alpha * xd_ref[pl.ds(ioff, tile_m), :]

    @pl.when(t < n_t - 1)
    def _():
        h_ref[pl.ds(woff, tile_m), :] = h_new.astype(jnp.bfloat16)

    # Final propagation step: attribute filter + ReLU + MLP head, emit output.
    @pl.when(t == n_t - 1)
    def _():
        h1 = jnp.maximum(
            jnp.dot(h_new.astype(jnp.bfloat16), f_ref[...],
                    preferred_element_type=jnp.float32), 0.0)
        z = jnp.maximum(
            jnp.dot(h1.astype(jnp.bfloat16), w1_ref[...],
                    preferred_element_type=jnp.float32) + b1_ref[...], 0.0)
        out = jnp.dot(z.astype(jnp.bfloat16), w2_ref[...],
                      preferred_element_type=jnp.float32) + b2_ref[...]
        out_ref[...] = out.astype(out_ref.dtype)


# -----------------------------------------------------------------------------
# Wrapper: one-time padding/casts, then the pallas_call.
# -----------------------------------------------------------------------------
def _round_up(n, m):
    return ((n + m - 1) // m) * m


def _pad2(a, r, c):
    return jnp.pad(a, ((0, r - a.shape[0]), (0, c - a.shape[1])))


def _nbytes(a):
    return a.size * a.dtype.itemsize


def dsgc_prepare(G, Fm, W1, b1, W2, b2, *, tile_m=256):
    """One-time padding + bf16 casts of the static graph filters / head weights
    (hoisted out of the per-call forward, per the perf review)."""
    N = G.shape[0]
    D = Fm.shape[0]
    H = W1.shape[1]
    C = W2.shape[1]
    Np = _round_up(N, tile_m)
    Dp = _round_up(D, 128)
    Hp = _round_up(H, 128)
    Cp = _round_up(C, 128)
    return dict(
        dims=(N, D, H, C, Np, Dp, Hp, Cp),
        G=_pad2(G, Np, Np).astype(jnp.bfloat16),
        F=_pad2(Fm, Dp, Dp).astype(jnp.bfloat16),
        W1=_pad2(W1, Dp, Hp).astype(jnp.bfloat16),
        b1=_pad2(b1, 1, Hp).astype(jnp.float32),
        W2=_pad2(W2, Hp, Cp).astype(jnp.bfloat16),
        b2=_pad2(b2, 1, Cp).astype(jnp.float32),
    )


def dsgc_forward(x, mask, prep, *, alpha, keep_prob, repeat, tile_m=256):
    if repeat < 1:
        # The kernel grid requires at least one propagation step; the PyTorch
        # module always uses repeat >= 1 as well.
        raise ValueError("repeat must be >= 1")

    N, D, H, C, Np, Dp, Hp, Cp = prep["dims"]
    assert x.shape == (N, D) and mask.shape == (N, D)

    xp = _pad2(x, Np, Dp).astype(jnp.float32)
    mp = _pad2(mask, Np, Dp).astype(jnp.bfloat16)   # 0/1 exact in bf16, half the bytes

    Gp, Fp, W1p, b1p, W2p, b2p = (prep[k] for k in ("G", "F", "W1", "b1", "W2", "b2"))

    n_row = Np // tile_m
    grid = (repeat, n_row)
    last_t = repeat - 1

    # VMEM budget: resident scratch (G single copy, h ping/pong bf16, xd f32)
    # + double-buffered pipelined operands + output block, with headroom.
    resident = (_nbytes(Gp) + 2 * Np * Dp * 2 + Np * Dp * 4
                + 2 * (_nbytes(xp) + _nbytes(mp) + _nbytes(Fp) + _nbytes(W1p)
                       + _nbytes(b1p) + _nbytes(W2p) + _nbytes(b2p))
                + 2 * tile_m * Cp * 4)
    vmem_limit = int(min(64 * 1024 * 1024,
                         max(32 * 1024 * 1024, resident * 5 // 4 + (4 << 20))))

    kernel = functools.partial(
        dsgc_kernel,
        alpha=float(alpha),
        inv_keep=float(1.0 / keep_prob),
        n_pad=Np,
        tile_m=tile_m,
    )

    out = pl.pallas_call(
        kernel,
        out_shape=jax.ShapeDtypeStruct((Np, Cp), jnp.float32),
        grid=grid,
        in_specs=[
            pl.BlockSpec((Np, Dp), lambda t, i: (0, 0)),   # x (read once at t==0)
            pl.BlockSpec((Np, Dp), lambda t, i: (0, 0)),   # dropout mask (bf16)
            pl.BlockSpec(memory_space=pl.ANY),             # G: stays in HBM, DMA'd once
            pl.BlockSpec((Dp, Dp), lambda t, i: (0, 0)),   # F attribute filter
            pl.BlockSpec((Dp, Hp), lambda t, i: (0, 0)),   # W1
            pl.BlockSpec((1, Hp), lambda t, i: (0, 0)),    # b1
            pl.BlockSpec((Hp, Cp), lambda t, i: (0, 0)),   # W2
            pl.BlockSpec((1, Cp), lambda t, i: (0, 0)),    # b2
        ],
        # Gate the out block index on the last propagation step so no stale
        # VMEM tile is ever written back to HBM during t < repeat-1.
        out_specs=pl.BlockSpec(
            (tile_m, Cp), lambda t, i: (jnp.where(t == last_t, i, 0), 0)),
        scratch_shapes=[
            pltpu.VMEM((Np, Np), jnp.bfloat16),      # resident G (single copy)
            pltpu.VMEM((2 * Np, Dp), jnp.bfloat16),  # h ping/pong (bf16)
            pltpu.VMEM((Np, Dp), jnp.float32),       # dropped input xd (f32)
            pltpu.SemaphoreType.DMA,                 # G copy completion
        ],
        compiler_params=pltpu.CompilerParams(
            # Both axes are strictly sequential: the recurrence needs the full
            # resident h_t before any row tile of h_{t+1} can be used.
            dimension_semantics=("arbitrary", "arbitrary"),
            vmem_limit_bytes=vmem_limit),
    )(xp, mp, Gp, Fp, W1p, b1p, W2p, b2p)

    return out[:N, :C]


# -----------------------------------------------------------------------------
# Pure-JAX references for correctness checking.
# -----------------------------------------------------------------------------
def dsgc_ref_f32(x, mask, G, Fm, W1, b1, W2, b2, *, alpha, keep_prob, repeat):
    xd = x * mask / keep_prob
    h = xd
    for _ in range(repeat):
        h = (1.0 - alpha) * (G @ h) + alpha * xd
    h = jnp.maximum(h @ Fm, 0.0)
    h = jnp.maximum(h @ W1 + b1, 0.0)
    return h @ W2 + b2


def dsgc_ref_bf16(x, mask, G, Fm, W1, b1, W2, b2, *, alpha, keep_prob, repeat):
    # Mirrors the kernel's bf16-operand / f32-accumulation numerics.
    bf = jnp.bfloat16
    xd = x * mask / keep_prob
    Gb, Fb = G.astype(bf), Fm.astype(bf)
    W1b, W2b = W1.astype(bf), W2.astype(bf)
    h = xd
    for _ in range(repeat):
        gh = jnp.dot(Gb, h.astype(bf), preferred_element_type=jnp.float32)
        h = (1.0 - alpha) * gh + alpha * xd
    h = jnp.maximum(jnp.dot(h.astype(bf), Fb, preferred_element_type=jnp.float32), 0.0)
    h = jnp.maximum(jnp.dot(h.astype(bf), W1b, preferred_element_type=jnp.float32) + b1, 0.0)
    return jnp.dot(h.astype(bf), W2b, preferred_element_type=jnp.float32) + b2


def _sym_norm_adj(A):
    """D^{-1/2} (A + I) D^{-1/2}."""
    n = A.shape[0]
    A = A + jnp.eye(n, dtype=A.dtype)
    d = jnp.sum(A, axis=1)
    dinv = 1.0 / jnp.sqrt(jnp.maximum(d, 1e-12))
    return A * dinv[:, None] * dinv[None, :]


if __name__ == "__main__":
    # Small shapes implied by the module: N objects, D attributes (num_features),
    # hidden_dim H, num_classes C.  Chosen so padding (D,H,C -> 128) and the
    # 256-row tiling (N=200 -> 256) are exercised.
    N, D, H, C = 200, 100, 64, 10
    dprate = 0.5
    alpha = 0.1
    repeat = 3
    keep_prob = 1.0 - dprate

    key = jax.random.PRNGKey(0)
    kx, kmask, kgadj, kw1, kb1, kw2, kb2 = jax.random.split(key, 7)

    # Input features (dense graph-signal matrix).
    x = jax.random.normal(kx, (N, D), dtype=jnp.float32)

    # Dropout mask (training=True semantics), deterministic via PRNGKey(0).
    mask = jax.random.bernoulli(kmask, p=keep_prob, shape=(N, D)).astype(jnp.float32)

    # Object-space propagation matrix G: deterministic random symmetric graph,
    # symmetrically normalized with self loops.
    A_obj = (jax.random.uniform(kgadj, (N, N)) < 0.05).astype(jnp.float32)
    A_obj = jnp.maximum(A_obj, A_obj.T)
    G = _sym_norm_adj(A_obj)

    # Attribute-space filter F = 0.5 * (I + F_adj), F_adj a normalized PMI-like
    # co-occurrence adjacency built from the features.
    Xb = (x > 0.0).astype(jnp.float32)
    A_attr = (Xb.T @ Xb > 0.0).astype(jnp.float32)
    F_adj = _sym_norm_adj(A_attr)
    Fm = 0.5 * (jnp.eye(D, dtype=jnp.float32) + F_adj)

    # final_encoder parameters (PyTorch Linear default-style init), stored
    # pre-transposed as (in, out); biases kept 2D (1, out) for TPU layout.
    lim1 = 1.0 / jnp.sqrt(jnp.float32(D))
    lim2 = 1.0 / jnp.sqrt(jnp.float32(H))
    W1 = jax.random.uniform(kw1, (D, H), minval=-lim1, maxval=lim1, dtype=jnp.float32)
    b1 = jax.random.uniform(kb1, (1, H), minval=-lim1, maxval=lim1, dtype=jnp.float32)
    W2 = jax.random.uniform(kw2, (H, C), minval=-lim2, maxval=lim2, dtype=jnp.float32)
    b2 = jax.random.uniform(kb2, (1, C), minval=-lim2, maxval=lim2, dtype=jnp.float32)

    # One-time weight preparation (padding + bf16 casts), then the kernel call.
    prep = dsgc_prepare(G, Fm, W1, b1, W2, b2, tile_m=256)
    out = dsgc_forward(x, mask, prep, alpha=alpha, keep_prob=keep_prob,
                       repeat=repeat, tile_m=256)
    out = jax.block_until_ready(out)
    assert out.shape == (N, C)

    # Tight check against a reference that mirrors the kernel's bf16 numerics.
    ref_bf = dsgc_ref_bf16(x, mask, G, Fm, W1, b1, W2, b2,
                           alpha=alpha, keep_prob=keep_prob, repeat=repeat)
    assert jnp.allclose(out, ref_bf, atol=5e-3, rtol=5e-3)

    # Loose sanity check against the pure-f32 reference (bf16 MXU operands).
    ref_f32 = dsgc_ref_f32(x, mask, G, Fm, W1, b1, W2, b2,
                           alpha=alpha, keep_prob=keep_prob, repeat=repeat)
    assert jnp.allclose(out, ref_f32, atol=1e-1, rtol=1e-1)

    print("KERNEL_OK")
</pallas_src>

<mosaic_0001>
module attributes {stable_mosaic.version = 11 : i64} {
  func.func @dsgc_kernel(%arg0: i32, %arg1: i32, %arg2: memref<256x128xf32, #tpu.memory_space<vmem>>, %arg3: memref<256x128xbf16, #tpu.memory_space<vmem>>, %arg4: memref<256x256xbf16, #tpu.memory_space<any>>, %arg5: memref<128x128xbf16, #tpu.memory_space<vmem>>, %arg6: memref<128x128xbf16, #tpu.memory_space<vmem>>, %arg7: memref<1x128xf32, #tpu.memory_space<vmem>>, %arg8: memref<128x128xbf16, #tpu.memory_space<vmem>>, %arg9: memref<1x128xf32, #tpu.memory_space<vmem>>, %arg10: memref<256x128xf32, #tpu.memory_space<vmem>>, %arg11: memref<256x256xbf16, #tpu.memory_space<vmem>>, %arg12: memref<512x128xbf16, #tpu.memory_space<vmem>>, %arg13: memref<256x128xf32, #tpu.memory_space<vmem>>, %arg14: memref<!tpu.dma_semaphore, #tpu.memory_space<semaphore_mem>>) attributes {dimension_semantics = [#tpu.dimension_semantics<arbitrary>, #tpu.dimension_semantics<arbitrary>], iteration_bounds = array<i64: 3, 1>, scalar_prefetch = 0 : i64, scratch_operands = 4 : i64, tpu.core_type = #tpu.core_type<tc>, window_params = [{pipeline_mode = #tpu.pipeline_mode<synchronous>, transform_indices = @transform_0, window_bounds = array<i64: 256, 128>}, {pipeline_mode = #tpu.pipeline_mode<synchronous>, transform_indices = @transform_1, window_bounds = array<i64: 256, 128>}, {}, {pipeline_mode = #tpu.pipeline_mode<synchronous>, transform_indices = @transform_3, window_bounds = array<i64: 128, 128>}, {pipeline_mode = #tpu.pipeline_mode<synchronous>, transform_indices = @transform_4, window_bounds = array<i64: 128, 128>}, {pipeline_mode = #tpu.pipeline_mode<synchronous>, transform_indices = @transform_5, window_bounds = array<i64: 1, 128>}, {pipeline_mode = #tpu.pipeline_mode<synchronous>, transform_indices = @transform_6, window_bounds = array<i64: 128, 128>}, {pipeline_mode = #tpu.pipeline_mode<synchronous>, transform_indices = @transform_7, window_bounds = array<i64: 1, 128>}, {transform_indices = @transform_8, window_bounds = array<i64: 256, 128>}]} {
    %c256_i32 = arith.constant 256 : i32
    %0 = arith.muli %arg1, %c256_i32 : i32
    %1 = tpu.assume_multiple %0, 256 : i32
    %c2_i32 = arith.constant 2 : i32
    %c0_i32 = arith.constant 0 : i32
    %2 = arith.cmpi eq, %c2_i32, %c0_i32 : i32
    %c1_i32 = arith.constant 1 : i32
    %3 = arith.select %2, %c1_i32, %c2_i32 : i32
    %4 = arith.remsi %arg0, %3 : i32
    %c0_i32_0 = arith.constant 0 : i32
    %5 = arith.cmpi ne, %4, %c0_i32_0 : i32
    %c0_i32_1 = arith.constant 0 : i32
    %6 = arith.cmpi slt, %4, %c0_i32_1 : i32
    %c0_i32_2 = arith.constant 0 : i32
    %7 = arith.cmpi slt, %3, %c0_i32_2 : i32
    %8 = arith.xori %6, %7 : i1
    %9 = arith.andi %8, %5 : i1
    %10 = arith.addi %4, %3 : i32
    %11 = arith.select %9, %10, %4 : i32
    %c256_i32_3 = arith.constant 256 : i32
    %12 = arith.muli %11, %c256_i32_3 : i32
    %13 = tpu.assume_multiple %12, 256 : i32
    %c1_i32_4 = arith.constant 1 : i32
    %14 = arith.addi %arg0, %c1_i32_4 : i32
    %c2_i32_5 = arith.constant 2 : i32
    %c0_i32_6 = arith.constant 0 : i32
    %15 = arith.cmpi eq, %c2_i32_5, %c0_i32_6 : i32
    %c1_i32_7 = arith.constant 1 : i32
    %16 = arith.select %15, %c1_i32_7, %c2_i32_5 : i32
    %17 = arith.remsi %14, %16 : i32
    %c0_i32_8 = arith.constant 0 : i32
    %18 = arith.cmpi ne, %17, %c0_i32_8 : i32
    %c0_i32_9 = arith.constant 0 : i32
    %19 = arith.cmpi slt, %17, %c0_i32_9 : i32
    %c0_i32_10 = arith.constant 0 : i32
    %20 = arith.cmpi slt, %16, %c0_i32_10 : i32
    %21 = arith.xori %19, %20 : i1
    %22 = arith.andi %21, %18 : i1
    %23 = arith.addi %17, %16 : i32
    %24 = arith.select %22, %23, %17 : i32
    %c256_i32_11 = arith.constant 256 : i32
    %25 = arith.muli %24, %c256_i32_11 : i32
    %c256_i32_12 = arith.constant 256 : i32
    %26 = arith.muli %arg1, %c256_i32_12 : i32
    %27 = arith.addi %25, %26 : i32
    %28 = tpu.assume_multiple %27, 256 : i32
    %c0_i32_13 = arith.constant 0 : i32
    %29 = arith.cmpi eq, %arg0, %c0_i32_13 : i32
    %c0_i32_14 = arith.constant 0 : i32
    %30 = arith.cmpi eq, %arg1, %c0_i32_14 : i32
    %31 = arith.andi %29, %30 : i1
    %32 = arith.extui %31 : i1 to i32
    %c0_i32_15 = arith.constant 0 : i32
    %33 = arith.cmpi ne, %32, %c0_i32_15 : i32
    scf.if %33 {
      tpu.enqueue_dma source(%arg4 : memref<256x256xbf16, #tpu.memory_space<any>>) target(%arg11 : memref<256x256xbf16, #tpu.memory_space<vmem>>) target_semaphore(%arg14 : memref<!tpu.dma_semaphore, #tpu.memory_space<semaphore_mem>>)
      %c0_24 = arith.constant 0 : index
      %c0_25 = arith.constant 0 : index
      %52 = vector.load %arg2[%c0_24, %c0_25] : memref<256x128xf32, #tpu.memory_space<vmem>>, vector<256x128xf32>
      %c0_26 = arith.constant 0 : index
      %c0_27 = arith.constant 0 : index
      %53 = vector.load %arg3[%c0_26, %c0_27] : memref<256x128xbf16, #tpu.memory_space<vmem>>, vector<256x128xbf16>
      %54 = arith.extf %53 : vector<256x128xbf16> to vector<256x128xf32>
      %55 = arith.mulf %52, %54 : vector<256x128xf32>
      %cst_28 = arith.constant 2.000000e+00 : f32
      %56 = vector.broadcast %cst_28 : f32 to vector<256x128xf32>
      %57 = arith.mulf %55, %56 : vector<256x128xf32>
      %c0_29 = arith.constant 0 : index
      %c0_30 = arith.constant 0 : index
      %58 = vector.load %arg13[%c0_29, %c0_30] : memref<256x128xf32, #tpu.memory_space<vmem>>, vector<256x128xf32>
      tpu.vector_store %arg13[%c0_29, %c0_30], %57 {strides = array<i32>} : memref<256x128xf32, #tpu.memory_space<vmem>>, vector<256x128xf32>,
      %59 = arith.truncf %57 : vector<256x128xf32> to vector<256x128xbf16>
      %c0_31 = arith.constant 0 : index
      %c0_32 = arith.constant 0 : index
      %60 = vector.load %arg12[%c0_31, %c0_32] : memref<512x128xbf16, #tpu.memory_space<vmem>>, vector<256x128xbf16>
      tpu.vector_store %arg12[%c0_31, %c0_32], %59 {strides = array<i32>} : memref<512x128xbf16, #tpu.memory_space<vmem>>, vector<256x128xbf16>,
      tpu.wait_dma2 semaphore(%arg14 : memref<!tpu.dma_semaphore, #tpu.memory_space<semaphore_mem>>) src(%arg4 : memref<256x256xbf16, #tpu.memory_space<any>>) dst(%arg11 : memref<256x256xbf16, #tpu.memory_space<vmem>>)
    } else {
    }
    %34 = arith.index_cast %1 : i32 to index
    %c0 = arith.constant 0 : index
    %35 = vector.load %arg11[%34, %c0] : memref<256x256xbf16, #tpu.memory_space<vmem>>, vector<256x256xbf16>
    %36 = arith.index_cast %13 : i32 to index
    %c0_16 = arith.constant 0 : index
    %37 = vector.load %arg12[%36, %c0_16] : memref<512x128xbf16, #tpu.memory_space<vmem>>, vector<256x128xbf16>
    %cst = arith.constant dense<0.000000e+00> : vector<256x128xf32>
    %38 = tpu.matmul %35, %37, %cst {dimension_numbers = #tpu.dot_dimension_numbers<[1], [0], [0], [1], [0, 0, 1, 1], [], []>} : vector<256x256xbf16>, vector<256x128xbf16>, vector<256x128xf32> -> vector<256x128xf32>
    %cst_17 = arith.constant 0.899999976 : f32
    %39 = vector.broadcast %cst_17 : f32 to vector<256x128xf32>
    %40 = arith.mulf %39, %38 : vector<256x128xf32>
    %41 = arith.index_cast %1 : i32 to index
    %c0_18 = arith.constant 0 : index
    %42 = vector.load %arg13[%41, %c0_18] : memref<256x128xf32, #tpu.memory_space<vmem>>, vector<256x128xf32>
    %cst_19 = arith.constant 1.000000e-01 : f32
    %43 = vector.broadcast %cst_19 : f32 to vector<256x128xf32>
    %44 = arith.mulf %43, %42 : vector<256x128xf32>
    %45 = arith.addf %40, %44 : vector<256x128xf32>
    %c2_i32_20 = arith.constant 2 : i32
    %46 = arith.cmpi slt, %arg0, %c2_i32_20 : i32
    %47 = arith.extui %46 : i1 to i32
    %c0_i32_21 = arith.constant 0 : i32
    %48 = arith.cmpi ne, %47, %c0_i32_21 : i32
    scf.if %48 {
      %52 = arith.truncf %45 : vector<256x128xf32> to vector<256x128xbf16>
      %53 = arith.index_cast %28 : i32 to index
      %c0_24 = arith.constant 0 : index
      %54 = vector.load %arg12[%53, %c0_24] : memref<512x128xbf16, #tpu.memory_space<vmem>>, vector<256x128xbf16>
      tpu.vector_store %arg12[%53, %c0_24], %52 {strides = array<i32>} : memref<512x128xbf16, #tpu.memory_space<vmem>>, vector<256x128xbf16>,
    } else {
    }
    %c2_i32_22 = arith.constant 2 : i32
    %49 = arith.cmpi eq, %arg0, %c2_i32_22 : i32
    %50 = arith.extui %49 : i1 to i32
    %c0_i32_23 = arith.constant 0 : i32
    %51 = arith.cmpi ne, %50, %c0_i32_23 : i32
    scf.if %51 {
      %52 = arith.truncf %45 : vector<256x128xf32> to vector<256x128xbf16>
      %c0_24 = arith.constant 0 : index
      %c0_25 = arith.constant 0 : index
      %53 = vector.load %arg5[%c0_24, %c0_25] : memref<128x128xbf16, #tpu.memory_space<vmem>>, vector<128x128xbf16>
      %cst_26 = arith.constant dense<0.000000e+00> : vector<256x128xf32>
      %54 = tpu.matmul %52, %53, %cst_26 {dimension_numbers = #tpu.dot_dimension_numbers<[1], [0], [0], [1], [0, 0, 1, 1], [], []>} : vector<256x128xbf16>, vector<128x128xbf16>, vector<256x128xf32> -> vector<256x128xf32>
      %cst_27 = arith.constant 0.000000e+00 : f32
      %55 = vector.broadcast %cst_27 : f32 to vector<256x128xf32>
      %56 = arith.maximumf %54, %55 : vector<256x128xf32>
      %57 = arith.truncf %56 : vector<256x128xf32> to vector<256x128xbf16>
      %c0_28 = arith.constant 0 : index
      %c0_29 = arith.constant 0 : index
      %58 = vector.load %arg6[%c0_28, %c0_29] : memref<128x128xbf16, #tpu.memory_space<vmem>>, vector<128x128xbf16>
      %cst_30 = arith.constant dense<0.000000e+00> : vector<256x128xf32>
      %59 = tpu.matmul %57, %58, %cst_30 {dimension_numbers = #tpu.dot_dimension_numbers<[1], [0], [0], [1], [0, 0, 1, 1], [], []>} : vector<256x128xbf16>, vector<128x128xbf16>, vector<256x128xf32> -> vector<256x128xf32>
      %c0_31 = arith.constant 0 : index
      %c0_32 = arith.constant 0 : index
      %60 = vector.load %arg7[%c0_31, %c0_32] : memref<1x128xf32, #tpu.memory_space<vmem>>, vector<1x128xf32>
      %61 = vector.broadcast %60 : vector<1x128xf32> to vector<256x128xf32>
      %62 = arith.addf %59, %61 : vector<256x128xf32>
      %cst_33 = arith.constant 0.000000e+00 : f32
      %63 = vector.broadcast %cst_33 : f32 to vector<256x128xf32>
      %64 = arith.maximumf %62, %63 : vector<256x128xf32>
      %65 = arith.truncf %64 : vector<256x128xf32> to vector<256x128xbf16>
      %c0_34 = arith.constant 0 : index
      %c0_35 = arith.constant 0 : index
      %66 = vector.load %arg8[%c0_34, %c0_35] : memref<128x128xbf16, #tpu.memory_space<vmem>>, vector<128x128xbf16>
      %cst_36 = arith.constant dense<0.000000e+00> : vector<256x128xf32>
      %67 = tpu.matmul %65, %66, %cst_36 {dimension_numbers = #tpu.dot_dimension_numbers<[1], [0], [0], [1], [0, 0, 1, 1], [], []>} : vector<256x128xbf16>, vector<128x128xbf16>, vector<256x128xf32> -> vector<256x128xf32>
      %c0_37 = arith.constant 0 : index
      %c0_38 = arith.constant 0 : index
      %68 = vector.load %arg9[%c0_37, %c0_38] : memref<1x128xf32, #tpu.memory_space<vmem>>, vector<1x128xf32>
      %69 = vector.broadcast %68 : vector<1x128xf32> to vector<256x128xf32>
      %70 = arith.addf %67, %69 : vector<256x128xf32>
      %c0_39 = arith.constant 0 : index
      %c0_40 = arith.constant 0 : index
      %71 = vector.load %arg10[%c0_39, %c0_40] : memref<256x128xf32, #tpu.memory_space<vmem>>, vector<256x128xf32>
      tpu.vector_store %arg10[%c0_39, %c0_40], %70 {strides = array<i32>} : memref<256x128xf32, #tpu.memory_space<vmem>>, vector<256x128xf32>,
    } else {
    }
    return
  }
  func.func @transform_0(%arg0: i32, %arg1: i32) -> (i32, i32) {
    %c0_i32 = arith.constant 0 : i32
    %c0_i32_0 = arith.constant 0 : i32
    %c0_i32_1 = arith.constant 0 : i32
    return %c0_i32, %c0_i32_0 : i32, i32
  }
  func.func @transform_1(%arg0: i32, %arg1: i32) -> (i32, i32) {
    %c0_i32 = arith.constant 0 : i32
    %c0_i32_0 = arith.constant 0 : i32
    %c0_i32_1 = arith.constant 0 : i32
    return %c0_i32, %c0_i32_0 : i32, i32
  }
  func.func @transform_3(%arg0: i32, %arg1: i32) -> (i32, i32) {
    %c0_i32 = arith.constant 0 : i32
    %c0_i32_0 = arith.constant 0 : i32
    %c0_i32_1 = arith.constant 0 : i32
    return %c0_i32, %c0_i32_0 : i32, i32
  }
  func.func @transform_4(%arg0: i32, %arg1: i32) -> (i32, i32) {
    %c0_i32 = arith.constant 0 : i32
    %c0_i32_0 = arith.constant 0 : i32
    %c0_i32_1 = arith.constant 0 : i32
    return %c0_i32, %c0_i32_0 : i32, i32
  }
  func.func @transform_5(%arg0: i32, %arg1: i32) -> (i32, i32) {
    %c0_i32 = arith.constant 0 : i32
    %c0_i32_0 = arith.constant 0 : i32
    %c0_i32_1 = arith.constant 0 : i32
    return %c0_i32, %c0_i32_0 : i32, i32
  }
  func.func @transform_6(%arg0: i32, %arg1: i32) -> (i32, i32) {
    %c0_i32 = arith.constant 0 : i32
    %c0_i32_0 = arith.constant 0 : i32
    %c0_i32_1 = arith.constant 0 : i32
    return %c0_i32, %c0_i32_0 : i32, i32
  }
  func.func @transform_7(%arg0: i32, %arg1: i32) -> (i32, i32) {
    %c0_i32 = arith.constant 0 : i32
    %c0_i32_0 = arith.constant 0 : i32
    %c0_i32_1 = arith.constant 0 : i32
    return %c0_i32, %c0_i32_0 : i32, i32
  }
  func.func @transform_8(%arg0: i32, %arg1: i32) -> (i32, i32) {
    %c2_i32 = arith.constant 2 : i32
    %0 = arith.cmpi eq, %arg0, %c2_i32 : i32
    %c0_i32 = arith.constant 0 : i32
    %1 = arith.select %0, %arg1, %c0_i32 : i32
    %c0_i32_0 = arith.constant 0 : i32
    %c0_i32_1 = arith.constant 0 : i32
    return %1, %c0_i32_0 : i32, i32
  }
}

</mosaic_0001>

<llo_original>
// kernel: tpu_custom_call.1
$region0: #{tpu_custom_call.1}
  #allocation0 [shape = 'u32[]', space=smem, size = 0x4, offset = 0x4, fixed_abs, tag = 'smem constant byte address 0x4 - core index']
  #allocation1 [shape = 'u32[144,128]{1,0:T(1,128)}', space=vmem, size = 0x12000, scoped, tag = 'internal scratch']
  #allocation2 [shape = 'bf16[256,256]{1,0:T(16,128)(2,1)}', space=vmem, size = 0x20000, scoped, tag = 'scratch operand']
  #allocation3 [shape = 'bf16[512,128]{1,0:T(16,128)(2,1)}', space=vmem, size = 0x20000, scoped, tag = 'scratch operand']
  #allocation4 [shape = 'f32[256,128]{1,0:T(8,128)}', space=vmem, size = 0x20000, scoped, tag = 'scratch operand']
  #allocation5 [shape = 's32[1]{0}', space=sflag, size = 0x4, scoped, tag = 'scratch operand']
  #allocation16 [shape = 's32[]', space=sflag, size = 0x4, offset = 0, fixed_abs, tag = 'sflag constant byte address 0x0 - dummy sync flag']
  %s0 = inlined_call_operand.hbm [shape: f32[256,128], index: 0, kind: input, shape index: {}]
  %s1 = inlined_call_operand.hbm [shape: bf16[256,128], index: 1, kind: input, shape index: {}]
  %s2 = inlined_call_operand.hbm [shape: bf16[256,256], index: 2, kind: input, shape index: {}]
  %s3 = inlined_call_operand.hbm [shape: bf16[128,128], index: 3, kind: input, shape index: {}]
  %s4 = inlined_call_operand.hbm [shape: bf16[128,128], index: 4, kind: input, shape index: {}]
  %s5 = inlined_call_operand.vmem [shape: f32[1,128], index: 5, kind: input, shape index: {}]
  %s6 = inlined_call_operand.hbm [shape: bf16[128,128], index: 6, kind: input, shape index: {}]
  %s7 = inlined_call_operand.vmem [shape: f32[1,128], index: 7, kind: input, shape index: {}]
  %s8 = inlined_call_operand.hbm [shape: f32[256,128], index: 8, kind: output, shape index: {}]
  %s9 = sld [smem:[#allocation0]]
  $region93: #{tpu_custom_call.1} parent=0
    _
  %s11 = ssub.s32 1, %s9
  %s12 = scalar_select 0, %s11, %s9
  $region1: #{tpu_custom_call.1} parent=0
    #allocation6 [shape = 'u8[131072]{0}', space=vmem, size = 0x20000, scoped, tag = 'input window, operand 0, single buffered']
    #allocation7 [shape = 's32[2]{0}', space=sflag, size = 0x8, scoped, tag = 'scoped memory for tpu_custom_call.1']
    #allocation8 [shape = 's32[2]{0}', space=sflag, size = 0x8, scoped, tag = 'scoped memory for tpu_custom_call.1']
    #allocation9 [shape = 'u8[65536]{0}', space=vmem, size = 0x10000, scoped, tag = 'input window, operand 1, single buffered']
    #allocation10 [shape = 's32[1]{0}', space=sflag, size = 0x4, scoped, tag = 'scoped memory for tpu_custom_call.1']
    #allocation11 [shape = 'u8[32768]{0}', space=vmem, size = 0x8000, scoped, tag = 'input window, operand 3, single buffered']
    #allocation12 [shape = 'u8[32768]{0}', space=vmem, size = 0x8000, scoped, tag = 'input window, operand 4, single buffered']
    #allocation13 [shape = 's32[1]{0}', space=sflag, size = 0x4, scoped, tag = 'scoped memory for tpu_custom_call.1']
    #allocation14 [shape = 'u8[32768]{0}', space=vmem, size = 0x8000, scoped, tag = 'input window, operand 6, single buffered']
    #allocation15 [shape = 'u8[262144]{0}', space=vmem, size = 0x40000, scoped, tag = 'output window, operand 0']
    %13 = vsyncpa [#allocation7], 0
    %14 = vsyncpa [#allocation10], 0
    %15 = vsyncpa [#allocation13], 0
    %16 = vsyncpa [#allocation8], 0
    %s17 = scalar_lea.sflag [#allocation8], 1
    %18 = vsyncpa %s17, 0
    loop: start=0, step=1, limit=5
    $region2: #{tpu_custom_call.1} parent=1 // loop_pre_header
      _
    $region3: #{tpu_custom_call.1} parent=1 // loop_header
      %s20 = sphi 0, %s24
      %p21 = scmp.ge.s32.totalorder %s20, 5
      %s27 = sphi 0, %s39
      %s28 = sphi 0, %s35
      %s29 = sphi 0, %s27
      %s30 = sphi 0, %s28
      %s31 = sphi 0, %s29
      %s32 = sphi 0, %s30
      %s40 = sphi 0, %s40
      %s42 = sphi 0, %s40
      %s43 = sphi 0, %s42
      %s57 = sphi 0, %s43
      %s61 = sphi 0, %s61
      %s63 = sphi 0, %s61
      %s64 = sphi 0, %s63
      %s78 = sphi 0, %s64
      %s82 = sphi 0, %s82
      %s84 = sphi 0, %s82
      %s85 = sphi 0, %s84
      %s99 = sphi 0, %s85
      %s103 = sphi 0, %s103
      %s105 = sphi 0, %s103
      %s106 = sphi 0, %s105
      %s120 = sphi 0, %s106
      %s124 = sphi 0, %s124
      %s126 = sphi 0, %s124
      %s127 = sphi 0, %s126
      %s141 = sphi 0, %s127
      %s145 = sphi 0, %s145
      %s147 = sphi 0, %s145
      %s148 = sphi 0, %s147
      %s162 = sphi 0, %s148
      %s166 = sphi 0, %s166
      %s168 = sphi 0, %s166
      %s169 = sphi 0, %s168
      %s183 = sphi 0, %s169
      %s193 = sphi 0, %s195
      %s196 = sphi 0, %s193
      %s197 = sphi 0, %s196
      %s213 = sphi 0, %s197
    $region4: #{tpu_custom_call.1} parent=1 // loop_header_branch
      %23 = sbr.rel (%p21) target = $region8
    $region5: #{tpu_custom_call.1} parent=1 // loop_body
      %s25 = ssub.s32 %s20, 1
      %s26 = ssub.s32 %s20, 2
      %s33 = sadd.s32 1, %s28
      %p34 = scmp.ge.s32.totalorder %s33, 1
      %s35 = scalar_select %p34, 0, %s33
      %s36 = sadd.s32 1, %s27
      %s37 = scalar_select %p34, %s36, %s27
      %p38 = scmp.ge.s32.totalorder %s37, 3
      %s39 = scalar_select %p38, 0, %s37
      %s41 = sadd.s32 %s40, 1
      %p44 = scmp.eq.s32.totalorder %s20, 2
      %p45 = scmp.ne.s32.totalorder %s40, %s42
      %p46 = scmp.eq.s32.totalorder %s20, 0
      %p47 = por %p45, %p46
      %p48 = scmp.ne.s32.totalorder %s40, %s42
      %p49 = scmp.eq.s32.totalorder %s25, 2
      %p50 = por %p48, %p49
      %p51 = scmp.ne.s32.totalorder %s42, %s43
      %p52 = scmp.eq.s32.totalorder %s25, 0
      %p53 = por %p51, %p52
      %p54 = scmp.ne.s32.totalorder %s42, %s43
      %p55 = scmp.eq.s32.totalorder %s26, 2
      %p56 = por %p54, %p55
      %p58 = scmp.ne.s32.totalorder %s43, %s57
      %p59 = scmp.eq.s32.totalorder %s26, 0
      %p60 = por %p58, %p59
      %s62 = sadd.s32 %s61, 1
      %p65 = scmp.eq.s32.totalorder %s20, 2
      %p66 = scmp.ne.s32.totalorder %s61, %s63
      %p67 = scmp.eq.s32.totalorder %s20, 0
      %p68 = por %p66, %p67
      %p69 = scmp.ne.s32.totalorder %s61, %s63
      %p70 = scmp.eq.s32.totalorder %s25, 2
      %p71 = por %p69, %p70
      %p72 = scmp.ne.s32.totalorder %s63, %s64
      %p73 = scmp.eq.s32.totalorder %s25, 0
      %p74 = por %p72, %p73
      %p75 = scmp.ne.s32.totalorder %s63, %s64
      %p76 = scmp.eq.s32.totalorder %s26, 2
      %p77 = por %p75, %p76
      %p79 = scmp.ne.s32.totalorder %s64, %s78
      %p80 = scmp.eq.s32.totalorder %s26, 0
      %p81 = por %p79, %p80
      %s83 = sadd.s32 %s82, 1
      %p86 = scmp.eq.s32.totalorder %s20, 2
      %p87 = scmp.ne.s32.totalorder %s82, %s84
      %p88 = scmp.eq.s32.totalorder %s20, 0
      %p89 = por %p87, %p88
      %p90 = scmp.ne.s32.totalorder %s82, %s84
      %p91 = scmp.eq.s32.totalorder %s25, 2
      %p92 = por %p90, %p91
      %p93 = scmp.ne.s32.totalorder %s84, %s85
      %p94 = scmp.eq.s32.totalorder %s25, 0
      %p95 = por %p93, %p94
      %p96 = scmp.ne.s32.totalorder %s84, %s85
      %p97 = scmp.eq.s32.totalorder %s26, 2
      %p98 = por %p96, %p97
      %p100 = scmp.ne.s32.totalorder %s85, %s99
      %p101 = scmp.eq.s32.totalorder %s26, 0
      %p102 = por %p100, %p101
      %s104 = sadd.s32 %s103, 1
      %p107 = scmp.eq.s32.totalorder %s20, 2
      %p108 = scmp.ne.s32.totalorder %s103, %s105
      %p109 = scmp.eq.s32.totalorder %s20, 0
      %p110 = por %p108, %p109
      %p111 = scmp.ne.s32.totalorder %s103, %s105
      %p112 = scmp.eq.s32.totalorder %s25, 2
      %p113 = por %p111, %p112
      %p114 = scmp.ne.s32.totalorder %s105, %s106
      %p115 = scmp.eq.s32.totalorder %s25, 0
      %p116 = por %p114, %p115
      %p117 = scmp.ne.s32.totalorder %s105, %s106
      %p118 = scmp.eq.s32.totalorder %s26, 2
      %p119 = por %p117, %p118
      %p121 = scmp.ne.s32.totalorder %s106, %s120
      %p122 = scmp.eq.s32.totalorder %s26, 0
      %p123 = por %p121, %p122
      %s125 = sadd.s32 %s124, 1
      %p128 = scmp.eq.s32.totalorder %s20, 2
      %p129 = scmp.ne.s32.totalorder %s124, %s126
      %p130 = scmp.eq.s32.totalorder %s20, 0
      %p131 = por %p129, %p130
      %p132 = scmp.ne.s32.totalorder %s124, %s126
      %p133 = scmp.eq.s32.totalorder %s25, 2
      %p134 = por %p132, %p133
      %p135 = scmp.ne.s32.totalorder %s126, %s127
      %p136 = scmp.eq.s32.totalorder %s25, 0
      %p137 = por %p135, %p136
      %p138 = scmp.ne.s32.totalorder %s126, %s127
      %p139 = scmp.eq.s32.totalorder %s26, 2
      %p140 = por %p138, %p139
      %p142 = scmp.ne.s32.totalorder %s127, %s141
      %p143 = scmp.eq.s32.totalorder %s26, 0
      %p144 = por %p142, %p143
      %s146 = sadd.s32 %s145, 1
      %p149 = scmp.eq.s32.totalorder %s20, 2
      %p150 = scmp.ne.s32.totalorder %s145, %s147
      %p151 = scmp.eq.s32.totalorder %s20, 0
      %p152 = por %p150, %p151
      %p153 = scmp.ne.s32.totalorder %s145, %s147
      %p154 = scmp.eq.s32.totalorder %s25, 2
      %p155 = por %p153, %p154
      %p156 = scmp.ne.s32.totalorder %s147, %s148
      %p157 = scmp.eq.s32.totalorder %s25, 0
      %p158 = por %p156, %p157
      %p159 = scmp.ne.s32.totalorder %s147, %s148
      %p160 = scmp.eq.s32.totalorder %s26, 2
      %p161 = por %p159, %p160
      %p163 = scmp.ne.s32.totalorder %s148, %s162
      %p164 = scmp.eq.s32.totalorder %s26, 0
      %p165 = por %p163, %p164
      %s167 = sadd.s32 %s166, 1
      %p170 = scmp.eq.s32.totalorder %s20, 2
      %p171 = scmp.ne.s32.totalorder %s166, %s168
      %p172 = scmp.eq.s32.totalorder %s20, 0
      %p173 = por %p171, %p172
      %p174 = scmp.ne.s32.totalorder %s166, %s168
      %p175 = scmp.eq.s32.totalorder %s25, 2
      %p176 = por %p174, %p175
      %p177 = scmp.ne.s32.totalorder %s168, %s169
      %p178 = scmp.eq.s32.totalorder %s25, 0
      %p179 = por %p177, %p178
      %p180 = scmp.ne.s32.totalorder %s168, %s169
      %p181 = scmp.eq.s32.totalorder %s26, 2
      %p182 = por %p180, %p181
      %p184 = scmp.ne.s32.totalorder %s169, %s183
      %p185 = scmp.eq.s32.totalorder %s26, 0
      %p186 = por %p184, %p185
      %p187 = scmp.eq.s32.totalorder %s27, 2
      %s188 = scalar_select %p187, %s28, 0
      %p189 = scmp.eq.s32.totalorder %s39, 2
      %s190 = scalar_select %p189, %s35, 0
      %s191 = ssub.s32 %s188, %s190
      %p192 = scmp.eq.s32.totalorder %s191, 0
      %s194 = sadd.s32 %s193, 1
      %s195 = scalar_select %p192, %s193, %s194
      %p198 = pneg %p192
      %p199 = scmp.eq.s32.totalorder %s20, 2
      %p200 = por %p198, %p199
      %p201 = scmp.ne.s32.totalorder %s193, %s196
      %p202 = scmp.eq.s32.totalorder %s20, 0
      %p203 = por %p201, %p202
      %p204 = scmp.ne.s32.totalorder %s193, %s196
      %p205 = scmp.eq.s32.totalorder %s25, 2
      %p206 = por %p204, %p205
      %p207 = scmp.ne.s32.totalorder %s196, %s197
      %p208 = scmp.eq.s32.totalorder %s25, 0
      %p209 = por %p207, %p208
      %p210 = scmp.ne.s32.totalorder %s196, %s197
      %p211 = scmp.eq.s32.totalorder %s26, 2
      %p212 = por %p210, %p211
      %p214 = scmp.ne.s32.totalorder %s197, %s213
      %p215 = scmp.eq.s32.totalorder %s26, 0
      %p216 = por %p214, %p215
      %p217 = scmp.le.s32.totalorder 1, %s20
      %p218 = scmp.lt.s32.totalorder %s20, 4
      %p219 = pnand %p217, %p218
      %p220 = pneg %p219
      // Predicated region
      $region9: #{tpu_custom_call.1} parent=5 // pred_check
        _
      $region10: #{tpu_custom_call.1} parent=5 // pred_check_branch
        %222 = sbr.rel (%p219) target = $region12
      $region11: #{tpu_custom_call.1} parent=5 // pred_region
        %s223 = ssub.s32 %s20, 1
        // Predicated region
        $region13: #{tpu_custom_call.1} parent=11 // pred_check
          %p224 = pneg %p53
        $region14: #{tpu_custom_call.1} parent=11 // pred_check_branch
          %226 = sbr.rel (%p224) target = $region16
        $region15: #{tpu_custom_call.1} parent=11 // pred_region
          %s228 = ssub.s32 4096, 4096
          %229 = vsyncadd [#allocation7], %s228
          %s230 = sshll.u32 [#allocation6], 4
          %s231 = int_to_ptr.vmem [resolvable:$true] %s230
          %236 = dma.hbm_to_vmem [thread:$0]  %s0, 4096, %s231, [#allocation7], 128, 128, 8
        $region16: #{tpu_custom_call.1} parent=11 // pred_fallthru
          _
        // Predicated region
        $region17: #{tpu_custom_call.1} parent=11 // pred_check
          %p237 = pneg %p74
        $region18: #{tpu_custom_call.1} parent=11 // pred_check_branch
          %239 = sbr.rel (%p237) target = $region20
        $region19: #{tpu_custom_call.1} parent=11 // pred_region
          %s241 = ssub.s32 2048, 2048
          %242 = vsyncadd [#allocation10], %s241
          %s243 = sshll.u32 [#allocation9], 4
          %s244 = int_to_ptr.vmem [resolvable:$true] %s243
          %249 = dma.hbm_to_vmem [thread:$0]  %s1, 2048, %s244, [#allocation10], 64, 64, 4
        $region20: #{tpu_custom_call.1} parent=11 // pred_fallthru
          _
        // Predicated region
        $region21: #{tpu_custom_call.1} parent=11 // pred_check
          %p250 = pneg %p95
        $region22: #{tpu_custom_call.1} parent=11 // pred_check_branch
          %252 = sbr.rel (%p250) target = $region24
        $region23: #{tpu_custom_call.1} parent=11 // pred_region
          %s254 = ssub.s32 1024, 1024
          %255 = vsyncadd [#allocation10], %s254
          %s256 = sshll.u32 [#allocation11], 4
          %s257 = int_to_ptr.vmem [resolvable:$true] %s256
          %262 = dma.hbm_to_vmem [thread:$0]  %s3, 1024, %s257, [#allocation10], 64, 64, 4
        $region24: #{tpu_custom_call.1} parent=11 // pred_fallthru
          _
        // Predicated region
        $region25: #{tpu_custom_call.1} parent=11 // pred_check
          %p263 = pneg %p116
        $region26: #{tpu_custom_call.1} parent=11 // pred_check_branch
          %265 = sbr.rel (%p263) target = $region28
        $region27: #{tpu_custom_call.1} parent=11 // pred_region
          %s267 = ssub.s32 1024, 1024
          %268 = vsyncadd [#allocation13], %s267
          %s269 = sshll.u32 [#allocation12], 4
          %s270 = int_to_ptr.vmem [resolvable:$true] %s269
          %275 = dma.hbm_to_vmem [thread:$0]  %s4, 1024, %s270, [#allocation13], 64, 64, 4
        $region28: #{tpu_custom_call.1} parent=11 // pred_fallthru
          _
        // Predicated region
        $region29: #{tpu_custom_call.1} parent=11 // pred_check
          %p276 = pneg %p137
        $region30: #{tpu_custom_call.1} parent=11 // pred_check_branch
          %278 = sbr.rel (%p276) target = $region32
        $region31: #{tpu_custom_call.1} parent=11 // pred_region
          _
        $region32: #{tpu_custom_call.1} parent=11 // pred_fallthru
          _
        // Predicated region
        $region33: #{tpu_custom_call.1} parent=11 // pred_check
          %p279 = pneg %p158
        $region34: #{tpu_custom_call.1} parent=11 // pred_check_branch
          %281 = sbr.rel (%p279) target = $region36
        $region35: #{tpu_custom_call.1} parent=11 // pred_region
          %s283 = ssub.s32 1024, 1024
          %284 = vsyncadd [#allocation13], %s283
          %s285 = sshll.u32 [#allocation14], 4
          %s286 = int_to_ptr.vmem [resolvable:$true] %s285
          %291 = dma.hbm_to_vmem [thread:$0]  %s6, 1024, %s286, [#allocation13], 64, 64, 4
        $region36: #{tpu_custom_call.1} parent=11 // pred_fallthru
          _
        // Predicated region
        $region37: #{tpu_custom_call.1} parent=11 // pred_check
          %p292 = pneg %p179
        $region38: #{tpu_custom_call.1} parent=11 // pred_check_branch
          %294 = sbr.rel (%p292) target = $region40
        $region39: #{tpu_custom_call.1} parent=11 // pred_region
          _
        $region40: #{tpu_custom_call.1} parent=11 // pred_fallthru
          _
      $region12: #{tpu_custom_call.1} parent=5 // pred_fallthru
        _
      %p295 = scmp.lt.s32.totalorder %s20, 3
      // Predicated region
      $region41: #{tpu_custom_call.1} parent=5 // pred_check
        %p296 = pneg %p295
      $region42: #{tpu_custom_call.1} parent=5 // pred_check_branch
        %298 = sbr.rel (%p296) target = $region44
      $region43: #{tpu_custom_call.1} parent=5 // pred_region
        _
      $region44: #{tpu_custom_call.1} parent=5 // pred_fallthru
        _
      %p299 = scmp.le.s32.totalorder 1, %s20
      %p300 = scmp.lt.s32.totalorder %s20, 4
      %p301 = pnand %p299, %p300
      %p302 = pneg %p301
      // Predicated region
      $region45: #{tpu_custom_call.1} parent=5 // pred_check
        _
      $region46: #{tpu_custom_call.1} parent=5 // pred_check_branch
        %304 = sbr.rel (%p301) target = $region48
      $region47: #{tpu_custom_call.1} parent=5 // pred_region
        %s305 = ssub.s32 %s20, 1
        // Predicated region
        $region49: #{tpu_custom_call.1} parent=47 // pred_check
          %p306 = pneg %p53
        $region50: #{tpu_custom_call.1} parent=47 // pred_check_branch
          %308 = sbr.rel (%p306) target = $region52
        $region51: #{tpu_custom_call.1} parent=47 // pred_region
          %309 = dma.done [#allocation7], 4096
        $region52: #{tpu_custom_call.1} parent=47 // pred_fallthru
          _
        // Predicated region
        $region53: #{tpu_custom_call.1} parent=47 // pred_check
          %p310 = pneg %p74
        $region54: #{tpu_custom_call.1} parent=47 // pred_check_branch
          %312 = sbr.rel (%p310) target = $region56
        $region55: #{tpu_custom_call.1} parent=47 // pred_region
          %313 = dma.done [#allocation10], 2048
        $region56: #{tpu_custom_call.1} parent=47 // pred_fallthru
          _
        // Predicated region
        $region57: #{tpu_custom_call.1} parent=47 // pred_check
          %p314 = pneg %p95
        $region58: #{tpu_custom_call.1} parent=47 // pred_check_branch
          %316 = sbr.rel (%p314) target = $region60
        $region59: #{tpu_custom_call.1} parent=47 // pred_region
          %317 = dma.done [#allocation10], 1024
        $region60: #{tpu_custom_call.1} parent=47 // pred_fallthru
          _
        // Predicated region
        $region61: #{tpu_custom_call.1} parent=47 // pred_check
          %p318 = pneg %p116
        $region62: #{tpu_custom_call.1} parent=47 // pred_check_branch
          %320 = sbr.rel (%p318) target = $region64
        $region63: #{tpu_custom_call.1} parent=47 // pred_region
          %321 = dma.done [#allocation13], 1024
        $region64: #{tpu_custom_call.1} parent=47 // pred_fallthru
          _
        // Predicated region
        $region65: #{tpu_custom_call.1} parent=47 // pred_check
          %p322 = pneg %p158
        $region66: #{tpu_custom_call.1} parent=47 // pred_check_branch
          %324 = sbr.rel (%p322) target = $region68
        $region67: #{tpu_custom_call.1} parent=47 // pred_region
          %325 = dma.done [#allocation13], 1024
        $region68: #{tpu_custom_call.1} parent=47 // pred_fallthru
          _
        %p326 = pneg %p53
        %p327 = pneg %p50
        %p328 = pneg %p74
        %p329 = pneg %p71
        %p330 = pneg %p95
        %p331 = pneg %p92
        %p332 = pneg %p116
        %p333 = pneg %p113
        %p334 = pneg %p137
        %p335 = pneg %p134
        %p336 = pneg %p158
        %p337 = pneg %p155
        %p338 = pneg %p179
        %p339 = pneg %p176
        %p340 = pneg %p209
        %p341 = pneg %p206
        %s342 = sand.u32 %s196, 1
        %s343 = scalar_lea.sflag [#allocation8], %s342
        %s344 = sand.u32 %s196, 1
        %s345 = smul.addr %s344, 256
        %s346 = scalar_lea.vmem [#allocation15], %s345
        %p347 = scmp.eq.s32.totalorder %s29, 2
        %s348 = scalar_select %p347, %s30, 0
        %s349 = smul.u32 32, %s348
        %s351 = smul.u32 %s30, 256
        %p352 = scmp.lt.s32.totalorder %s29, 0
        %s353 = ssub.s32 0, %s29
        %s354 = scalar_select %p352, %s353, %s29
        %s355 = sand.u32 %s354, 1
        %s356 = ssub.s32 0, %s355
        %s357 = scalar_select %p352, %s356, %s355
        %p358 = scmp.ne.s32.totalorder %s357, 0
        %p359 = scmp.lt.s32.totalorder %s357, 0
        %p360 = pnand %p359, %p358
        %p361 = pneg %p360
        %s362 = sadd.s32 %s357, 2
        %s363 = scalar_select %p361, %s362, %s357
        %s364 = smul.u32 %s363, 256
        %s365 = sadd.s32 %s29, 1
        %p366 = scmp.lt.s32.totalorder %s365, 0
        %s367 = ssub.s32 0, %s365
        %s368 = scalar_select %p366, %s367, %s365
        %s369 = sand.u32 %s368, 1
        %s370 = ssub.s32 0, %s369
        %s371 = scalar_select %p366, %s370, %s369
        %p372 = scmp.ne.s32.totalorder %s371, 0
        %p373 = scmp.lt.s32.totalorder %s371, 0
        %p374 = pnand %p373, %p372
        %p375 = pneg %p374
        %s376 = sadd.s32 %s371, 2
        %s377 = scalar_select %p375, %s376, %s371
        %s378 = smul.u32 %s377, 256
        %s379 = sadd.s32 %s378, %s351
        %p380 = scmp.eq.s32.totalorder %s29, 0
        %p381 = scmp.eq.s32.totalorder %s30, 0
        %p382 = pnand %p380, %p381
        %p383 = pneg %p382
        // Predicated region
        $region69: #{tpu_custom_call.1} parent=47 // pred_check
          _
        $region70: #{tpu_custom_call.1} parent=47 // pred_check_branch
          %385 = sbr.rel (%p382) target = $region72
        $region71: #{tpu_custom_call.1} parent=47 // pred_region
          #allocation17 [shape = 'u32[9]{0}', space=smem, size = 0x24, scoped, tag = 'DMA stride descriptor']
          %s387 = sshll.u32 1, 14
          %s388 = sxor.u32 4294967295, %s387
          %s390 = sld [smem:[#allocation0]]
          %s391 = sadd.s32 2, %s390
          %s393 = sshll.u32 7, 26
          %s394 = sxor.u32 4294967295, %s393
          %s395 = sand.u32 0, %s394
          %s396 = sshll.u32 %s391, 26
          %s397 = sor.u32 %s395, %s396
          %s398 = sshll.u32 [#allocation2], 4
          %s399 = int_to_ptr.vmem [resolvable:$true] %s398
          %402 = sst [smem:[#allocation17]] 256
          %s403 = scalar_lea.smem [#allocation17], 1
          %404 = sst [smem:[%s403]] 256
          %s405 = scalar_lea.smem [#allocation17], 2
          %406 = sst [smem:[%s405]] 2
          %s407 = scalar_lea.smem [#allocation17], 3
          %408 = sst [smem:[%s407]] 64
          %s409 = scalar_lea.smem [#allocation17], 4
          %410 = sst [smem:[%s409]] 128
          %s411 = scalar_lea.smem [#allocation17], 5
          %412 = sst [smem:[%s411]] 2
          %s413 = scalar_lea.smem [#allocation17], 6
          %414 = sst [smem:[%s413]] 128
          %s415 = scalar_lea.smem [#allocation17], 7
          %416 = sst [smem:[%s415]] 64
          %s417 = scalar_lea.smem [#allocation17], 8
          %418 = sst [smem:[%s417]] 4
          %420 = dma.general %s2, 4096, %s399, [#allocation5], [#allocation16], [#allocation17], %s397, 0
          %v421 = vld [vmem:[#allocation6] sm:$0xff]
          %v422 = vld [vmem:[#allocation6 + $0x8] sm:$0xff]
          %v423 = vld [vmem:[#allocation6 + $0x10] sm:$0xff]
          %v424 = vld [vmem:[#allocation6 + $0x18] sm:$0xff]
          %v425 = vld [vmem:[#allocation6 + $0x20] sm:$0xff]
          %v426 = vld [vmem:[#allocation6 + $0x28] sm:$0xff]
          %v427 = vld [vmem:[#allocation6 + $0x30] sm:$0xff]
          %v428 = vld [vmem:[#allocation6 + $0x38] sm:$0xff]
          %v429 = vld [vmem:[#allocation6 + $0x40] sm:$0xff]
          %v430 = vld [vmem:[#allocation6 + $0x48] sm:$0xff]
          %v431 = vld [vmem:[#allocation6 + $0x50] sm:$0xff]
          %v432 = vld [vmem:[#allocation6 + $0x58] sm:$0xff]
          %v433 = vld [vmem:[#allocation6 + $0x60] sm:$0xff]
          %v434 = vld [vmem:[#allocation6 + $0x68] sm:$0xff]
          %v435 = vld [vmem:[#allocation6 + $0x70] sm:$0xff]
          %v436 = vld [vmem:[#allocation6 + $0x78] sm:$0xff]
          %v437 = vld [vmem:[#allocation6 + $0x80] sm:$0xff]
          %v438 = vld [vmem:[#allocation6 + $0x88] sm:$0xff]
          %v439 = vld [vmem:[#allocation6 + $0x90] sm:$0xff]
          %v440 = vld [vmem:[#allocation6 + $0x98] sm:$0xff]
          %v441 = vld [vmem:[#allocation6 + $0xa0] sm:$0xff]
          %v442 = vld [vmem:[#allocation6 + $0xa8] sm:$0xff]
          %v443 = vld [vmem:[#allocation6 + $0xb0] sm:$0xff]
          %v444 = vld [vmem:[#allocation6 + $0xb8] sm:$0xff]
          %v445 = vld [vmem:[#allocation6 + $0xc0] sm:$0xff]
          %v446 = vld [vmem:[#allocation6 + $0xc8] sm:$0xff]
          %v447 = vld [vmem:[#allocation6 + $0xd0] sm:$0xff]
          %v448 = vld [vmem:[#allocation6 + $0xd8] sm:$0xff]
          %v449 = vld [vmem:[#allocation6 + $0xe0] sm:$0xff]
          %v450 = vld [vmem:[#allocation6 + $0xe8] sm:$0xff]
          %v451 = vld [vmem:[#allocation6 + $0xf0] sm:$0xff]
          %v452 = vld [vmem:[#allocation6 + $0xf8] sm:$0xff]
          %v453 = vld [vmem:[#allocation9] sm:$0xf]
          %v454 = vld [vmem:[#allocation9 + $0x4] sm:$0xf]
          %v455 = vld [vmem:[#allocation9 + $0x8] sm:$0xf]
          %v456 = vld [vmem:[#allocation9 + $0xc] sm:$0xf]
          %v457 = vld [vmem:[#allocation9 + $0x10] sm:$0xf]
          %v458 = vld [vmem:[#allocation9 + $0x14] sm:$0xf]
          %v459 = vld [vmem:[#allocation9 + $0x18] sm:$0xf]
          %v460 = vld [vmem:[#allocation9 + $0x1c] sm:$0xf]
          %v461 = vld [vmem:[#allocation9 + $0x20] sm:$0xf]
          %v462 = vld [vmem:[#allocation9 + $0x24] sm:$0xf]
          %v463 = vld [vmem:[#allocation9 + $0x28] sm:$0xf]
          %v464 = vld [vmem:[#allocation9 + $0x2c] sm:$0xf]
          %v465 = vld [vmem:[#allocation9 + $0x30] sm:$0xf]
          %v466 = vld [vmem:[#allocation9 + $0x34] sm:$0xf]
          %v467 = vld [vmem:[#allocation9 + $0x38] sm:$0xf]
          %v468 = vld [vmem:[#allocation9 + $0x3c] sm:$0xf]
          %v469 = vld [vmem:[#allocation9 + $0x40] sm:$0xf]
          %v470 = vld [vmem:[#allocation9 + $0x44] sm:$0xf]
          %v471 = vld [vmem:[#allocation9 + $0x48] sm:$0xf]
          %v472 = vld [vmem:[#allocation9 + $0x4c] sm:$0xf]
          %v473 = vld [vmem:[#allocation9 + $0x50] sm:$0xf]
          %v474 = vld [vmem:[#allocation9 + $0x54] sm:$0xf]
          %v475 = vld [vmem:[#allocation9 + $0x58] sm:$0xf]
          %v476 = vld [vmem:[#allocation9 + $0x5c] sm:$0xf]
          %v477 = vld [vmem:[#allocation9 + $0x60] sm:$0xf]
          %v478 = vld [vmem:[#allocation9 + $0x64] sm:$0xf]
          %v479 = vld [vmem:[#allocation9 + $0x68] sm:$0xf]
          %v480 = vld [vmem:[#allocation9 + $0x6c] sm:$0xf]
          %v481 = vld [vmem:[#allocation9 + $0x70] sm:$0xf]
          %v482 = vld [vmem:[#allocation9 + $0x74] sm:$0xf]
          %v483 = vld [vmem:[#allocation9 + $0x78] sm:$0xf]
          %v484 = vld [vmem:[#allocation9 + $0x7c] sm:$0xf]
          %v485 = vunpack.c.l.bf16 %v453
          %v486 = vunpack.c.l.bf16 %v454
          %v487 = vunpack.c.l.bf16 %v455
          %v488 = vunpack.c.l.bf16 %v456
          %v489 = vunpack.c.l.bf16 %v457
          %v490 = vunpack.c.l.bf16 %v458
          %v491 = vunpack.c.l.bf16 %v459
          %v492 = vunpack.c.l.bf16 %v460
          %v493 = vunpack.c.l.bf16 %v461
          %v494 = vunpack.c.l.bf16 %v462
          %v495 = vunpack.c.l.bf16 %v463
          %v496 = vunpack.c.l.bf16 %v464
          %v497 = vunpack.c.l.bf16 %v465
          %v498 = vunpack.c.l.bf16 %v466
          %v499 = vunpack.c.l.bf16 %v467
          %v500 = vunpack.c.l.bf16 %v468
          %v501 = vunpack.c.l.bf16 %v469
          %v502 = vunpack.c.l.bf16 %v470
          %v503 = vunpack.c.l.bf16 %v471
          %v504 = vunpack.c.l.bf16 %v472
          %v505 = vunpack.c.l.bf16 %v473
          %v506 = vunpack.c.l.bf16 %v474
          %v507 = vunpack.c.l.bf16 %v475
          %v508 = vunpack.c.l.bf16 %v476
          %v509 = vunpack.c.l.bf16 %v477
          %v510 = vunpack.c.l.bf16 %v478
          %v511 = vunpack.c.l.bf16 %v479
          %v512 = vunpack.c.l.bf16 %v480
          %v513 = vunpack.c.l.bf16 %v481
          %v514 = vunpack.c.l.bf16 %v482
          %v515 = vunpack.c.l.bf16 %v483
          %v516 = vunpack.c.l.bf16 %v484
          %v517 = vmul.f32 %v421, %v485
          %v518 = vmul.f32 %v422, %v486
          %v519 = vmul.f32 %v423, %v487
          %v520 = vmul.f32 %v424, %v488
          %v521 = vmul.f32 %v425, %v489
          %v522 = vmul.f32 %v426, %v490
          %v523 = vmul.f32 %v427, %v491
          %v524 = vmul.f32 %v428, %v492
          %v525 = vmul.f32 %v429, %v493
          %v526 = vmul.f32 %v430, %v494
          %v527 = vmul.f32 %v431, %v495
          %v528 = vmul.f32 %v432, %v496
          %v529 = vmul.f32 %v433, %v497
          %v530 = vmul.f32 %v434, %v498
          %v531 = vmul.f32 %v435, %v499
          %v532 = vmul.f32 %v436, %v500
          %v533 = vmul.f32 %v437, %v501
          %v534 = vmul.f32 %v438, %v502
          %v535 = vmul.f32 %v439, %v503
          %v536 = vmul.f32 %v440, %v504
          %v537 = vmul.f32 %v441, %v505
          %v538 = vmul.f32 %v442, %v506
          %v539 = vmul.f32 %v443, %v507
          %v540 = vmul.f32 %v444, %v508
          %v541 = vmul.f32 %v445, %v509
          %v542 = vmul.f32 %v446, %v510
          %v543 = vmul.f32 %v447, %v511
          %v544 = vmul.f32 %v448, %v512
          %v545 = vmul.f32 %v449, %v513
          %v546 = vmul.f32 %v450, %v514
          %v547 = vmul.f32 %v451, %v515
          %v548 = vmul.f32 %v452, %v516
          %v549 = vmul.f32 %v517, 2.0
          %v550 = vmul.f32 %v518, 2.0
          %v551 = vmul.f32 %v519, 2.0
          %v552 = vmul.f32 %v520, 2.0
          %v553 = vmul.f32 %v521, 2.0
          %v554 = vmul.f32 %v522, 2.0
          %v555 = vmul.f32 %v523, 2.0
          %v556 = vmul.f32 %v524, 2.0
          %v557 = vmul.f32 %v525, 2.0
          %v558 = vmul.f32 %v526, 2.0
          %v559 = vmul.f32 %v527, 2.0
          %v560 = vmul.f32 %v528, 2.0
          %v561 = vmul.f32 %v529, 2.0
          %v562 = vmul.f32 %v530, 2.0
          %v563 = vmul.f32 %v531, 2.0
          %v564 = vmul.f32 %v532, 2.0
          %v565 = vmul.f32 %v533, 2.0
          %v566 = vmul.f32 %v534, 2.0
          %v567 = vmul.f32 %v535, 2.0
          %v568 = vmul.f32 %v536, 2.0
          %v569 = vmul.f32 %v537, 2.0
          %v570 = vmul.f32 %v538, 2.0
          %v571 = vmul.f32 %v539, 2.0
          %v572 = vmul.f32 %v540, 2.0
          %v573 = vmul.f32 %v541, 2.0
          %v574 = vmul.f32 %v542, 2.0
          %v575 = vmul.f32 %v543, 2.0
          %v576 = vmul.f32 %v544, 2.0
          %v577 = vmul.f32 %v545, 2.0
          %v578 = vmul.f32 %v546, 2.0
          %v579 = vmul.f32 %v547, 2.0
          %v580 = vmul.f32 %v548, 2.0
          %581 = vst [vmem:[#allocation4] sm:$0xff] %v549
          %582 = vst [vmem:[#allocation4 + $0x8] sm:$0xff] %v550
          %583 = vst [vmem:[#allocation4 + $0x10] sm:$0xff] %v551
          %584 = vst [vmem:[#allocation4 + $0x18] sm:$0xff] %v552
          %585 = vst [vmem:[#allocation4 + $0x20] sm:$0xff] %v553
          %586 = vst [vmem:[#allocation4 + $0x28] sm:$0xff] %v554
          %587 = vst [vmem:[#allocation4 + $0x30] sm:$0xff] %v555
          %588 = vst [vmem:[#allocation4 + $0x38] sm:$0xff] %v556
          %589 = vst [vmem:[#allocation4 + $0x40] sm:$0xff] %v557
          %590 = vst [vmem:[#allocation4 + $0x48] sm:$0xff] %v558
          %591 = vst [vmem:[#allocation4 + $0x50] sm:$0xff] %v559
          %592 = vst [vmem:[#allocation4 + $0x58] sm:$0xff] %v560
          %593 = vst [vmem:[#allocation4 + $0x60] sm:$0xff] %v561
          %594 = vst [vmem:[#allocation4 + $0x68] sm:$0xff] %v562
          %595 = vst [vmem:[#allocation4 + $0x70] sm:$0xff] %v563
          %596 = vst [vmem:[#allocation4 + $0x78] sm:$0xff] %v564
          %597 = vst [vmem:[#allocation4 + $0x80] sm:$0xff] %v565
          %598 = vst [vmem:[#allocation4 + $0x88] sm:$0xff] %v566
          %599 = vst [vmem:[#allocation4 + $0x90] sm:$0xff] %v567
          %600 = vst [vmem:[#allocation4 + $0x98] sm:$0xff] %v568
          %601 = vst [vmem:[#allocation4 + $0xa0] sm:$0xff] %v569
          %602 = vst [vmem:[#allocation4 + $0xa8] sm:$0xff] %v570
          %603 = vst [vmem:[#allocation4 + $0xb0] sm:$0xff] %v571
          %604 = vst [vmem:[#allocation4 + $0xb8] sm:$0xff] %v572
          %605 = vst [vmem:[#allocation4 + $0xc0] sm:$0xff] %v573
          %606 = vst [vmem:[#allocation4 + $0xc8] sm:$0xff] %v574
          %607 = vst [vmem:[#allocation4 + $0xd0] sm:$0xff] %v575
          %608 = vst [vmem:[#allocation4 + $0xd8] sm:$0xff] %v576
          %609 = vst [vmem:[#allocation4 + $0xe0] sm:$0xff] %v577
          %610 = vst [vmem:[#allocation4 + $0xe8] sm:$0xff] %v578
          %611 = vst [vmem:[#allocation4 + $0xf0] sm:$0xff] %v579
          %612 = vst [vmem:[#allocation4 + $0xf8] sm:$0xff] %v580
          %v613 = vpack.c.bf16 %v550, %v549
          %v614 = vpack.c.bf16 %v552, %v551
          %v615 = vpack.c.bf16 %v554, %v553
          %v616 = vpack.c.bf16 %v556, %v555
          %v617 = vpack.c.bf16 %v558, %v557
          %v618 = vpack.c.bf16 %v560, %v559
          %v619 = vpack.c.bf16 %v562, %v561
          %v620 = vpack.c.bf16 %v564, %v563
          %v621 = vpack.c.bf16 %v566, %v565
          %v622 = vpack.c.bf16 %v568, %v567
          %v623 = vpack.c.bf16 %v570, %v569
          %v624 = vpack.c.bf16 %v572, %v571
          %v625 = vpack.c.bf16 %v574, %v573
          %v626 = vpack.c.bf16 %v576, %v575
          %v627 = vpack.c.bf16 %v578, %v577
          %v628 = vpack.c.bf16 %v580, %v579
          %629 = vst [vmem:[#allocation3] sm:$0xff] %v613
          %630 = vst [vmem:[#allocation3 + $0x8] sm:$0xff] %v614
          %631 = vst [vmem:[#allocation3 + $0x10] sm:$0xff] %v615
          %632 = vst [vmem:[#allocation3 + $0x18] sm:$0xff] %v616
          %633 = vst [vmem:[#allocation3 + $0x20] sm:$0xff] %v617
          %634 = vst [vmem:[#allocation3 + $0x28] sm:$0xff] %v618
          %635 = vst [vmem:[#allocation3 + $0x30] sm:$0xff] %v619
          %636 = vst [vmem:[#allocation3 + $0x38] sm:$0xff] %v620
          %637 = vst [vmem:[#allocation3 + $0x40] sm:$0xff] %v621
          %638 = vst [vmem:[#allocation3 + $0x48] sm:$0xff] %v622
          %639 = vst [vmem:[#allocation3 + $0x50] sm:$0xff] %v623
          %640 = vst [vmem:[#allocation3 + $0x58] sm:$0xff] %v624
          %641 = vst [vmem:[#allocation3 + $0x60] sm:$0xff] %v625
          %642 = vst [vmem:[#allocation3 + $0x68] sm:$0xff] %v626
          %643 = vst [vmem:[#allocation3 + $0x70] sm:$0xff] %v627
          %644 = vst [vmem:[#allocation3 + $0x78] sm:$0xff] %v628
          %s645 = smul.u32 4, 32
          %s646 = smul.u32 %s645, 2
          %s647 = sshll.u32 %s646, 4
          %648 = dma.done [#allocation5], %s647
        $region72: #{tpu_custom_call.1} parent=47 // pred_fallthru
          _
        %s649 = sshra.s32 %s351, 4
        %s650 = sand.u32 %s351, 15
        %s651 = smul.u32 %s649, 2
        %s652 = smul.addr %s651, 8
        %s653 = scalar_lea.vmem [#allocation2], %s652
        %v654 = vld [vmem:[%s653] sm:$0xff]
        %v655 = vld [vmem:[%s653 + $0x8] sm:$0xff]
        %v656 = vld [vmem:[%s653 + $0x10] sm:$0xff]
        %v657 = vld [vmem:[%s653 + $0x18] sm:$0xff]
        %v658 = vld [vmem:[%s653 + $0x20] sm:$0xff]
        %v659 = vld [vmem:[%s653 + $0x28] sm:$0xff]
        %v660 = vld [vmem:[%s653 + $0x30] sm:$0xff]
        %v661 = vld [vmem:[%s653 + $0x38] sm:$0xff]
        %v662 = vld [vmem:[%s653 + $0x40] sm:$0xff]
        %v663 = vld [vmem:[%s653 + $0x48] sm:$0xff]
        %v664 = vld [vmem:[%s653 + $0x50] sm:$0xff]
        %v665 = vld [vmem:[%s653 + $0x58] sm:$0xff]
        %v666 = vld [vmem:[%s653 + $0x60] sm:$0xff]
        %v667 = vld [vmem:[%s653 + $0x68] sm:$0xff]
        %v668 = vld [vmem:[%s653 + $0x70] sm:$0xff]
        %v669 = vld [vmem:[%s653 + $0x78] sm:$0xff]
        %v670 = vld [vmem:[%s653 + $0x80] sm:$0xff]
        %v671 = vld [vmem:[%s653 + $0x88] sm:$0xff]
        %v672 = vld [vmem:[%s653 + $0x90] sm:$0xff]
        %v673 = vld [vmem:[%s653 + $0x98] sm:$0xff]
        %v674 = vld [vmem:[%s653 + $0xa0] sm:$0xff]
        %v675 = vld [vmem:[%s653 + $0xa8] sm:$0xff]
        %v676 = vld [vmem:[%s653 + $0xb0] sm:$0xff]
        %v677 = vld [vmem:[%s653 + $0xb8] sm:$0xff]
        %v678 = vld [vmem:[%s653 + $0xc0] sm:$0xff]
        %v679 = vld [vmem:[%s653 + $0xc8] sm:$0xff]
        %v680 = vld [vmem:[%s653 + $0xd0] sm:$0xff]
        %v681 = vld [vmem:[%s653 + $0xd8] sm:$0xff]
        %v682 = vld [vmem:[%s653 + $0xe0] sm:$0xff]
        %v683 = vld [vmem:[%s653 + $0xe8] sm:$0xff]
        %v684 = vld [vmem:[%s653 + $0xf0] sm:$0xff]
        %v685 = vld [vmem:[%s653 + $0xf8] sm:$0xff]
        %s686 = sshra.s32 %s364, 4
        %s687 = sand.u32 %s364, 15
        %s688 = smul.addr %s686, 8
        %s689 = scalar_lea.vmem [#allocation3], %s688
        %v690 = vld [vmem:[%s689] sm:$0xff]
        %v691 = vld [vmem:[%s689 + $0x8] sm:$0xff]
        %v692 = vld [vmem:[%s689 + $0x10] sm:$0xff]
        %v693 = vld [vmem:[%s689 + $0x18] sm:$0xff]
        %v694 = vld [vmem:[%s689 + $0x20] sm:$0xff]
        %v695 = vld [vmem:[%s689 + $0x28] sm:$0xff]
        %v696 = vld [vmem:[%s689 + $0x30] sm:$0xff]
        %v697 = vld [vmem:[%s689 + $0x38] sm:$0xff]
        %v698 = vld [vmem:[%s689 + $0x40] sm:$0xff]
        %v699 = vld [vmem:[%s689 + $0x48] sm:$0xff]
        %v700 = vld [vmem:[%s689 + $0x50] sm:$0xff]
        %v701 = vld [vmem:[%s689 + $0x58] sm:$0xff]
        %v702 = vld [vmem:[%s689 + $0x60] sm:$0xff]
        %v703 = vld [vmem:[%s689 + $0x68] sm:$0xff]
        %v704 = vld [vmem:[%s689 + $0x70] sm:$0xff]
        %v705 = vld [vmem:[%s689 + $0x78] sm:$0xff]
        %706 = vmatprep.subr.bf16.mxu0 0
        %707 = vmatpush1.bf16.msra.mxu0 %v690
        %708 = vmatprep.subr.bf16.mxu0 0
        %709 = vmatpush1.bf16.msra.mxu0 %v691
        %710 = vmatprep.subr.bf16.mxu0 0
        %711 = vmatpush1.bf16.msra.mxu0 %v692
        %712 = vmatprep.subr.bf16.mxu0 0
        %713 = vmatpush1.bf16.msra.mxu0 %v693
        %714 = vmatprep.subr.bf16.mxu0 0
        %715 = vmatpush1.bf16.msra.mxu0 %v694
        %716 = vmatprep.subr.bf16.mxu0 0
        %717 = vmatpush1.bf16.msra.mxu0 %v695
        %718 = vmatprep.subr.bf16.mxu0 0
        %719 = vmatpush1.bf16.msra.mxu0 %v696
        %720 = vmatprep.subr.bf16.mxu0 0
        %721 = vmatpush1.bf16.msra.mxu0 %v697
        %722 = vmatprep.subr.bf16.mxu0 0
        %723 = vmatpush1.bf16.msra.mxu0 %v698
        %724 = vmatprep.subr.bf16.mxu0 0
        %725 = vmatpush1.bf16.msra.mxu0 %v699
        %726 = vmatprep.subr.bf16.mxu0 0
        %727 = vmatpush1.bf16.msra.mxu0 %v700
        %728 = vmatprep.subr.bf16.mxu0 0
        %729 = vmatpush1.bf16.msra.mxu0 %v701
        %730 = vmatprep.subr.bf16.mxu0 0
        %731 = vmatpush1.bf16.msra.mxu0 %v702
        %732 = vmatprep.subr.bf16.mxu0 0
        %733 = vmatpush1.bf16.msra.mxu0 %v703
        %734 = vmatprep.subr.bf16.mxu0 0
        %735 = vmatpush1.bf16.msra.mxu0 %v704
        %736 = vmatprep.subr.bf16.mxu0 0
        %737 = vmatpush1.bf16.msra.mxu0 %v705
        %738 = vmatprep.mubr.bf16.mxu0 %v655
        %739 = vmatmul.mubr.bf16.gmra.mrb[0].mxu0 %v654
        %v740 = vpop.f32.mrb[0].mxu0
        %v741 = vadd.f32 0.0, %v740
        %v742 = vpop.f32.mrb[0].mxu0
        %v743 = vpop.f32.mrb[0].mxu0
        %v744 = vadd.f32 0.0, %v743
        %v745 = vpop.f32.mrb[0].mxu0
        %746 = vmatprep.mubr.bf16.mxu0 %v657
        %747 = vmatmul.mubr.bf16.gmra.mrb[0].mxu0 %v656
        %v748 = vpop.f32.mrb[0].mxu0
        %v749 = vadd.f32 0.0, %v748
        %v750 = vpop.f32.mrb[0].mxu0
        %v751 = vpop.f32.mrb[0].mxu0
        %v752 = vadd.f32 0.0, %v751
        %v753 = vpop.f32.mrb[0].mxu0
        %754 = vmatprep.mubr.bf16.mxu0 %v659
        %755 = vmatmul.mubr.bf16.gmra.mrb[0].mxu0 %v658
        %v756 = vpop.f32.mrb[0].mxu0
        %v757 = vadd.f32 0.0, %v756
        %v758 = vpop.f32.mrb[0].mxu0
        %v759 = vpop.f32.mrb[0].mxu0
        %v760 = vadd.f32 0.0, %v759
        %v761 = vpop.f32.mrb[0].mxu0
        %762 = vmatprep.mubr.bf16.mxu0 %v661
        %763 = vmatmul.mubr.bf16.gmra.mrb[0].mxu0 %v660
        %v764 = vpop.f32.mrb[0].mxu0
        %v765 = vadd.f32 0.0, %v764
        %v766 = vpop.f32.mrb[0].mxu0
        %v767 = vpop.f32.mrb[0].mxu0
        %v768 = vadd.f32 0.0, %v767
        %v769 = vpop.f32.mrb[0].mxu0
        %770 = vmatprep.mubr.bf16.mxu0 %v663
        %771 = vmatmul.mubr.bf16.gmra.mrb[0].mxu0 %v662
        %v772 = vpop.f32.mrb[0].mxu0
        %v773 = vadd.f32 0.0, %v772
        %v774 = vpop.f32.mrb[0].mxu0
        %v775 = vpop.f32.mrb[0].mxu0
        %v776 = vadd.f32 0.0, %v775
        %v777 = vpop.f32.mrb[0].mxu0
        %778 = vmatprep.mubr.bf16.mxu0 %v665
        %779 = vmatmul.mubr.bf16.gmra.mrb[0].mxu0 %v664
        %v780 = vpop.f32.mrb[0].mxu0
        %v781 = vadd.f32 0.0, %v780
        %v782 = vpop.f32.mrb[0].mxu0
        %v783 = vpop.f32.mrb[0].mxu0
        %v784 = vadd.f32 0.0, %v783
        %v785 = vpop.f32.mrb[0].mxu0
        %786 = vmatprep.mubr.bf16.mxu0 %v667
        %787 = vmatmul.mubr.bf16.gmra.mrb[0].mxu0 %v666
        %v788 = vpop.f32.mrb[0].mxu0
        %v789 = vadd.f32 0.0, %v788
        %v790 = vpop.f32.mrb[0].mxu0
        %v791 = vpop.f32.mrb[0].mxu0
        %v792 = vadd.f32 0.0, %v791
        %v793 = vpop.f32.mrb[0].mxu0
        %794 = vmatprep.mubr.bf16.mxu0 %v669
        %795 = vmatmul.mubr.bf16.gmra.mrb[0].mxu0 %v668
        %v796 = vpop.f32.mrb[0].mxu0
        %v797 = vadd.f32 0.0, %v796
        %v798 = vpop.f32.mrb[0].mxu0
        %v799 = vpop.f32.mrb[0].mxu0
        %v800 = vadd.f32 0.0, %v799
        %v801 = vpop.f32.mrb[0].mxu0
        %802 = vmatprep.mubr.bf16.mxu0 %v671
        %803 = vmatmul.mubr.bf16.gmra.mrb[0].mxu0 %v670
        %v804 = vpop.f32.mrb[0].mxu0
        %v805 = vadd.f32 0.0, %v804
        %v806 = vpop.f32.mrb[0].mxu0
        %v807 = vpop.f32.mrb[0].mxu0
        %v808 = vadd.f32 0.0, %v807
        %v809 = vpop.f32.mrb[0].mxu0
        %810 = vmatprep.mubr.bf16.mxu0 %v673
        %811 = vmatmul.mubr.bf16.gmra.mrb[0].mxu0 %v672
        %v812 = vpop.f32.mrb[0].mxu0
        %v813 = vadd.f32 0.0, %v812
        %v814 = vpop.f32.mrb[0].mxu0
        %v815 = vpop.f32.mrb[0].mxu0
        %v816 = vadd.f32 0.0, %v815
        %v817 = vpop.f32.mrb[0].mxu0
        %818 = vmatprep.mubr.bf16.mxu0 %v675
        %819 = vmatmul.mubr.bf16.gmra.mrb[0].mxu0 %v674
        %v820 = vpop.f32.mrb[0].mxu0
        %v821 = vadd.f32 0.0, %v820
        %v822 = vpop.f32.mrb[0].mxu0
        %v823 = vpop.f32.mrb[0].mxu0
        %v824 = vadd.f32 0.0, %v823
        %v825 = vpop.f32.mrb[0].mxu0
        %826 = vmatprep.mubr.bf16.mxu0 %v677
        %827 = vmatmul.mubr.bf16.gmra.mrb[0].mxu0 %v676
        %v828 = vpop.f32.mrb[0].mxu0
        %v829 = vadd.f32 0.0, %v828
        %v830 = vpop.f32.mrb[0].mxu0
        %v831 = vpop.f32.mrb[0].mxu0
        %v832 = vadd.f32 0.0, %v831
        %v833 = vpop.f32.mrb[0].mxu0
        %834 = vmatprep.mubr.bf16.mxu0 %v679
        %835 = vmatmul.mubr.bf16.gmra.mrb[0].mxu0 %v678
        %v836 = vpop.f32.mrb[0].mxu0
        %v837 = vadd.f32 0.0, %v836
        %v838 = vpop.f32.mrb[0].mxu0
        %v839 = vpop.f32.mrb[0].mxu0
        %v840 = vadd.f32 0.0, %v839
        %v841 = vpop.f32.mrb[0].mxu0
        %842 = vmatprep.mubr.bf16.mxu0 %v681
        %843 = vmatmul.mubr.bf16.gmra.mrb[0].mxu0 %v680
        %v844 = vpop.f32.mrb[0].mxu0
        %v845 = vadd.f32 0.0, %v844
        %v846 = vpop.f32.mrb[0].mxu0
        %v847 = vpop.f32.mrb[0].mxu0
        %v848 = vadd.f32 0.0, %v847
        %v849 = vpop.f32.mrb[0].mxu0
        %850 = vmatprep.mubr.bf16.mxu0 %v683
        %851 = vmatmul.mubr.bf16.gmra.mrb[0].mxu0 %v682
        %v852 = vpop.f32.mrb[0].mxu0
        %v853 = vadd.f32 0.0, %v852
        %v854 = vpop.f32.mrb[0].mxu0
        %v855 = vpop.f32.mrb[0].mxu0
        %v856 = vadd.f32 0.0, %v855
        %v857 = vpop.f32.mrb[0].mxu0
        %858 = vmatprep.mubr.bf16.mxu0 %v685
        %859 = vmatmul.mubr.bf16.gmra.mrb[0].mxu0 %v684
        %v860 = vpop.f32.mrb[0].mxu0
        %v861 = vadd.f32 0.0, %v860
        %v862 = vpop.f32.mrb[0].mxu0
        %v863 = vpop.f32.mrb[0].mxu0
        %v864 = vadd.f32 0.0, %v863
        %v865 = vpop.f32.mrb[0].mxu0
        %866 = vdwg.mxu0
        %v867 = vmul.f32 %v741, 0.9
        %v868 = vmul.f32 %v744, 0.9
        %v869 = vmul.f32 %v749, 0.9
        %v870 = vmul.f32 %v752, 0.9
        %v871 = vmul.f32 %v757, 0.9
        %v872 = vmul.f32 %v760, 0.9
        %v873 = vmul.f32 %v765, 0.9
        %v874 = vmul.f32 %v768, 0.9
        %v875 = vmul.f32 %v773, 0.9
        %v876 = vmul.f32 %v776, 0.9
        %v877 = vmul.f32 %v781, 0.9
        %v878 = vmul.f32 %v784, 0.9
        %v879 = vmul.f32 %v789, 0.9
        %v880 = vmul.f32 %v792, 0.9
        %v881 = vmul.f32 %v797, 0.9
        %v882 = vmul.f32 %v800, 0.9
        %v883 = vmul.f32 %v805, 0.9
        %v884 = vmul.f32 %v808, 0.9
        %v885 = vmul.f32 %v813, 0.9
        %v886 = vmul.f32 %v816, 0.9
        %v887 = vmul.f32 %v821, 0.9
        %v888 = vmul.f32 %v824, 0.9
        %v889 = vmul.f32 %v829, 0.9
        %v890 = vmul.f32 %v832, 0.9
        %v891 = vmul.f32 %v837, 0.9
        %v892 = vmul.f32 %v840, 0.9
        %v893 = vmul.f32 %v845, 0.9
        %v894 = vmul.f32 %v848, 0.9
        %v895 = vmul.f32 %v853, 0.9
        %v896 = vmul.f32 %v856, 0.9
        %v897 = vmul.f32 %v861, 0.9
        %v898 = vmul.f32 %v864, 0.9
        %s899 = scalar_lea.vmem [#allocation4], %s351
        %v900 = vld [vmem:[%s899] sm:$0xff]
        %v901 = vld [vmem:[%s899 + $0x8] sm:$0xff]
        %v902 = vld [vmem:[%s899 + $0x10] sm:$0xff]
        %v903 = vld [vmem:[%s899 + $0x18] sm:$0xff]
        %v904 = vld [vmem:[%s899 + $0x20] sm:$0xff]
        %v905 = vld [vmem:[%s899 + $0x28] sm:$0xff]
        %v906 = vld [vmem:[%s899 + $0x30] sm:$0xff]
        %v907 = vld [vmem:[%s899 + $0x38] sm:$0xff]
        %v908 = vld [vmem:[%s899 + $0x40] sm:$0xff]
        %v909 = vld [vmem:[%s899 + $0x48] sm:$0xff]
        %v910 = vld [vmem:[%s899 + $0x50] sm:$0xff]
        %v911 = vld [vmem:[%s899 + $0x58] sm:$0xff]
        %v912 = vld [vmem:[%s899 + $0x60] sm:$0xff]
        %v913 = vld [vmem:[%s899 + $0x68] sm:$0xff]
        %v914 = vld [vmem:[%s899 + $0x70] sm:$0xff]
        %v915 = vld [vmem:[%s899 + $0x78] sm:$0xff]
        %v916 = vld [vmem:[%s899 + $0x80] sm:$0xff]
        %v917 = vld [vmem:[%s899 + $0x88] sm:$0xff]
        %v918 = vld [vmem:[%s899 + $0x90] sm:$0xff]
        %v919 = vld [vmem:[%s899 + $0x98] sm:$0xff]
        %v920 = vld [vmem:[%s899 + $0xa0] sm:$0xff]
        %v921 = vld [vmem:[%s899 + $0xa8] sm:$0xff]
        %v922 = vld [vmem:[%s899 + $0xb0] sm:$0xff]
        %v923 = vld [vmem:[%s899 + $0xb8] sm:$0xff]
        %v924 = vld [vmem:[%s899 + $0xc0] sm:$0xff]
        %v925 = vld [vmem:[%s899 + $0xc8] sm:$0xff]
        %v926 = vld [vmem:[%s899 + $0xd0] sm:$0xff]
        %v927 = vld [vmem:[%s899 + $0xd8] sm:$0xff]
        %v928 = vld [vmem:[%s899 + $0xe0] sm:$0xff]
        %v929 = vld [vmem:[%s899 + $0xe8] sm:$0xff]
        %v930 = vld [vmem:[%s899 + $0xf0] sm:$0xff]
        %v931 = vld [vmem:[%s899 + $0xf8] sm:$0xff]
        %v932 = vmul.f32 %v900, 0.1
        %v933 = vmul.f32 %v901, 0.1
        %v934 = vmul.f32 %v902, 0.1
        %v935 = vmul.f32 %v903, 0.1
        %v936 = vmul.f32 %v904, 0.1
        %v937 = vmul.f32 %v905, 0.1
        %v938 = vmul.f32 %v906, 0.1
        %v939 = vmul.f32 %v907, 0.1
        %v940 = vmul.f32 %v908, 0.1
        %v941 = vmul.f32 %v909, 0.1
        %v942 = vmul.f32 %v910, 0.1
        %v943 = vmul.f32 %v911, 0.1
        %v944 = vmul.f32 %v912, 0.1
        %v945 = vmul.f32 %v913, 0.1
        %v946 = vmul.f32 %v914, 0.1
        %v947 = vmul.f32 %v915, 0.1
        %v948 = vmul.f32 %v916, 0.1
        %v949 = vmul.f32 %v917, 0.1
        %v950 = vmul.f32 %v918, 0.1
        %v951 = vmul.f32 %v919, 0.1
        %v952 = vmul.f32 %v920, 0.1
        %v953 = vmul.f32 %v921, 0.1
        %v954 = vmul.f32 %v922, 0.1
        %v955 = vmul.f32 %v923, 0.1
        %v956 = vmul.f32 %v924, 0.1
        %v957 = vmul.f32 %v925, 0.1
        %v958 = vmul.f32 %v926, 0.1
        %v959 = vmul.f32 %v927, 0.1
        %v960 = vmul.f32 %v928, 0.1
        %v961 = vmul.f32 %v929, 0.1
        %v962 = vmul.f32 %v930, 0.1
        %v963 = vmul.f32 %v931, 0.1
        %v964 = vadd.f32 %v867, %v932
        %v965 = vadd.f32 %v868, %v933
        %v966 = vadd.f32 %v869, %v934
        %v967 = vadd.f32 %v870, %v935
        %v968 = vadd.f32 %v871, %v936
        %v969 = vadd.f32 %v872, %v937
        %v970 = vadd.f32 %v873, %v938
        %v971 = vadd.f32 %v874, %v939
        %v972 = vadd.f32 %v875, %v940
        %v973 = vadd.f32 %v876, %v941
        %v974 = vadd.f32 %v877, %v942
        %v975 = vadd.f32 %v878, %v943
        %v976 = vadd.f32 %v879, %v944
        %v977 = vadd.f32 %v880, %v945
        %v978 = vadd.f32 %v881, %v946
        %v979 = vadd.f32 %v882, %v947
        %v980 = vadd.f32 %v883, %v948
        %v981 = vadd.f32 %v884, %v949
        %v982 = vadd.f32 %v885, %v950
        %v983 = vadd.f32 %v886, %v951
        %v984 = vadd.f32 %v887, %v952
        %v985 = vadd.f32 %v888, %v953
        %v986 = vadd.f32 %v889, %v954
        %v987 = vadd.f32 %v890, %v955
        %v988 = vadd.f32 %v891, %v956
        %v989 = vadd.f32 %v892, %v957
        %v990 = vadd.f32 %v893, %v958
        %v991 = vadd.f32 %v894, %v959
        %v992 = vadd.f32 %v895, %v960
        %v993 = vadd.f32 %v896, %v961
        %v994 = vadd.f32 %v897, %v962
        %v995 = vadd.f32 %v898, %v963
        %p996 = scmp.lt.s32.totalorder %s29, 2
        // Predicated region
        $region73: #{tpu_custom_call.1} parent=47 // pred_check
          %p997 = pneg %p996
        $region74: #{tpu_custom_call.1} parent=47 // pred_check_branch
          %999 = sbr.rel (%p997) target = $region76
        $region75: #{tpu_custom_call.1} parent=47 // pred_region
          %v1000 = vpack.c.bf16 %v965, %v964
          %v1001 = vpack.c.bf16 %v967, %v966
          %v1002 = vpack.c.bf16 %v969, %v968
          %v1003 = vpack.c.bf16 %v971, %v970
          %v1004 = vpack.c.bf16 %v973, %v972
          %v1005 = vpack.c.bf16 %v975, %v974
          %v1006 = vpack.c.bf16 %v977, %v976
          %v1007 = vpack.c.bf16 %v979, %v978
          %v1008 = vpack.c.bf16 %v981, %v980
          %v1009 = vpack.c.bf16 %v983, %v982
          %v1010 = vpack.c.bf16 %v985, %v984
          %v1011 = vpack.c.bf16 %v987, %v986
          %v1012 = vpack.c.bf16 %v989, %v988
          %v1013 = vpack.c.bf16 %v991, %v990
          %v1014 = vpack.c.bf16 %v993, %v992
          %v1015 = vpack.c.bf16 %v995, %v994
          %s1016 = sshra.s32 %s379, 4
          %s1017 = sand.u32 %s379, 15
          %s1018 = smul.addr %s1016, 8
          %s1019 = scalar_lea.vmem [#allocation3], %s1018
          %1020 = vst [vmem:[%s1019] sm:$0xff] %v1000
          %1021 = vst [vmem:[%s1019 + $0x8] sm:$0xff] %v1001
          %1022 = vst [vmem:[%s1019 + $0x10] sm:$0xff] %v1002
          %1023 = vst [vmem:[%s1019 + $0x18] sm:$0xff] %v1003
          %1024 = vst [vmem:[%s1019 + $0x20] sm:$0xff] %v1004
          %1025 = vst [vmem:[%s1019 + $0x28] sm:$0xff] %v1005
          %1026 = vst [vmem:[%s1019 + $0x30] sm:$0xff] %v1006
          %1027 = vst [vmem:[%s1019 + $0x38] sm:$0xff] %v1007
          %1028 = vst [vmem:[%s1019 + $0x40] sm:$0xff] %v1008
          %1029 = vst [vmem:[%s1019 + $0x48] sm:$0xff] %v1009
          %1030 = vst [vmem:[%s1019 + $0x50] sm:$0xff] %v1010
          %1031 = vst [vmem:[%s1019 + $0x58] sm:$0xff] %v1011
          %1032 = vst [vmem:[%s1019 + $0x60] sm:$0xff] %v1012
          %1033 = vst [vmem:[%s1019 + $0x68] sm:$0xff] %v1013
          %1034 = vst [vmem:[%s1019 + $0x70] sm:$0xff] %v1014
          %1035 = vst [vmem:[%s1019 + $0x78] sm:$0xff] %v1015
        $region76: #{tpu_custom_call.1} parent=47 // pred_fallthru
          _
        %p1036 = scmp.eq.s32.totalorder %s29, 2
        // Predicated region
        $region77: #{tpu_custom_call.1} parent=47 // pred_check
          %p1037 = pneg %p1036
        $region78: #{tpu_custom_call.1} parent=47 // pred_check_branch
          %1039 = sbr.rel (%p1037) target = $region80
        $region79: #{tpu_custom_call.1} parent=47 // pred_region
          %v1040 = vpack.c.bf16 %v965, %v964
          %v1041 = vpack.c.bf16 %v967, %v966
          %v1042 = vpack.c.bf16 %v969, %v968
          %v1043 = vpack.c.bf16 %v971, %v970
          %v1044 = vpack.c.bf16 %v973, %v972
          %v1045 = vpack.c.bf16 %v975, %v974
          %v1046 = vpack.c.bf16 %v977, %v976
          %v1047 = vpack.c.bf16 %v979, %v978
          %v1048 = vpack.c.bf16 %v981, %v980
          %v1049 = vpack.c.bf16 %v983, %v982
          %v1050 = vpack.c.bf16 %v985, %v984
          %v1051 = vpack.c.bf16 %v987, %v986
          %v1052 = vpack.c.bf16 %v989, %v988
          %v1053 = vpack.c.bf16 %v991, %v990
          %v1054 = vpack.c.bf16 %v993, %v992
          %v1055 = vpack.c.bf16 %v995, %v994
          %v1056 = vld [vmem:[#allocation11] sm:$0xf]
          %v1057 = vld [vmem:[#allocation11 + $0x4] sm:$0xf]
          %v1058 = vld [vmem:[#allocation11 + $0x8] sm:$0xf]
          %v1059 = vld [vmem:[#allocation11 + $0xc] sm:$0xf]
          %v1060 = vld [vmem:[#allocation11 + $0x10] sm:$0xf]
          %v1061 = vld [vmem:[#allocation11 + $0x14] sm:$0xf]
          %v1062 = vld [vmem:[#allocation11 + $0x18] sm:$0xf]
          %v1063 = vld [vmem:[#allocation11 + $0x1c] sm:$0xf]
          %v1064 = vld [vmem:[#allocation11 + $0x20] sm:$0xf]
          %v1065 = vld [vmem:[#allocation11 + $0x24] sm:$0xf]
          %v1066 = vld [vmem:[#allocation11 + $0x28] sm:$0xf]
          %v1067 = vld [vmem:[#allocation11 + $0x2c] sm:$0xf]
          %v1068 = vld [vmem:[#allocation11 + $0x30] sm:$0xf]
          %v1069 = vld [vmem:[#allocation11 + $0x34] sm:$0xf]
          %v1070 = vld [vmem:[#allocation11 + $0x38] sm:$0xf]
          %v1071 = vld [vmem:[#allocation11 + $0x3c] sm:$0xf]
          %v1088 = vunpack.c.l.b16 %v1056
          %v1089 = vunpack.c.l.b16 %v1057
          %v1090 = vunpack.c.l.b16 %v1058
          %v1091 = vunpack.c.l.b16 %v1059
          %v1092 = vunpack.c.l.b16 %v1060
          %v1093 = vunpack.c.l.b16 %v1061
          %v1094 = vunpack.c.l.b16 %v1062
          %v1095 = vunpack.c.l.b16 %v1063
          %v1096 = vunpack.c.l.b16 %v1064
          %v1097 = vunpack.c.l.b16 %v1065
          %v1098 = vunpack.c.l.b16 %v1066
          %v1099 = vunpack.c.l.b16 %v1067
          %v1100 = vunpack.c.l.b16 %v1068
          %v1101 = vunpack.c.l.b16 %v1069
          %v1102 = vunpack.c.l.b16 %v1070
          %v1103 = vunpack.c.l.b16 %v1071
          %v1104 = vpack.c.b16 %v1089, %v1088
          %v1105 = vpack.c.b16 %v1091, %v1090
          %v1106 = vpack.c.b16 %v1093, %v1092
          %v1107 = vpack.c.b16 %v1095, %v1094
          %v1108 = vpack.c.b16 %v1097, %v1096
          %v1109 = vpack.c.b16 %v1099, %v1098
          %v1110 = vpack.c.b16 %v1101, %v1100
          %v1111 = vpack.c.b16 %v1103, %v1102
          %1120 = vmatprep.subr.bf16.mxu0 0
          %1121 = vmatpush1.bf16.msra.mxu0 %v1104
          %1122 = vmatprep.subr.bf16.mxu0 0
          %1123 = vmatpush1.bf16.msra.mxu0 %v1105
          %1124 = vmatprep.subr.bf16.mxu0 0
          %1125 = vmatpush1.bf16.msra.mxu0 %v1106
          %1126 = vmatprep.subr.bf16.mxu0 0
          %1127 = vmatpush1.bf16.msra.mxu0 %v1107
          %1128 = vmatprep.subr.bf16.mxu0 0
          %1129 = vmatpush1.bf16.msra.mxu0 %v1108
          %1130 = vmatprep.subr.bf16.mxu0 0
          %1131 = vmatpush1.bf16.msra.mxu0 %v1109
          %1132 = vmatprep.subr.bf16.mxu0 0
          %1133 = vmatpush1.bf16.msra.mxu0 %v1110
          %1134 = vmatprep.subr.bf16.mxu0 0
          %1135 = vmatpush1.bf16.msra.mxu0 %v1111
          %1136 = vmatprep.subr.bf16.mxu0 0
          %1137 = vmatpush1.bf16.msra.mxu0 0
          %1138 = vmatprep.subr.bf16.mxu0 0
          %1139 = vmatpush1.bf16.msra.mxu0 0
          %1140 = vmatprep.subr.bf16.mxu0 0
          %1141 = vmatpush1.bf16.msra.mxu0 0
          %1142 = vmatprep.subr.bf16.mxu0 0
          %1143 = vmatpush1.bf16.msra.mxu0 0
          %1144 = vmatprep.subr.bf16.mxu0 0
          %1145 = vmatpush1.bf16.msra.mxu0 0
          %1146 = vmatprep.subr.bf16.mxu0 0
          %1147 = vmatpush1.bf16.msra.mxu0 0
          %1148 = vmatprep.subr.bf16.mxu0 0
          %1149 = vmatpush1.bf16.msra.mxu0 0
          %1150 = vmatprep.subr.bf16.mxu0 0
          %1151 = vmatpush1.bf16.msra.mxu0 0
          %1152 = vmatprep.mubr.bf16.mxu0 0
          %1153 = vmatmul.mubr.bf16.gmra.mrb[0].mxu0 %v1040
          %v1154 = vpop.f32.mrb[0].mxu0
          %v1155 = vadd.f32 0.0, %v1154
          %v1156 = vpop.f32.mrb[0].mxu0
          %v1157 = vpop.f32.mrb[0].mxu0
          %v1158 = vadd.f32 0.0, %v1157
          %v1159 = vpop.f32.mrb[0].mxu0
          %1160 = vmatprep.mubr.bf16.mxu0 0
          %1161 = vmatmul.mubr.bf16.gmra.mrb[0].mxu0 %v1041
          %v1162 = vpop.f32.mrb[0].mxu0
          %v1163 = vadd.f32 0.0, %v1162
          %v1164 = vpop.f32.mrb[0].mxu0
          %v1165 = vpop.f32.mrb[0].mxu0
          %v1166 = vadd.f32 0.0, %v1165
          %v1167 = vpop.f32.mrb[0].mxu0
          %1168 = vmatprep.mubr.bf16.mxu0 0
          %1169 = vmatmul.mubr.bf16.gmra.mrb[0].mxu0 %v1042
          %v1170 = vpop.f32.mrb[0].mxu0
          %v1171 = vadd.f32 0.0, %v1170
          %v1172 = vpop.f32.mrb[0].mxu0
          %v1173 = vpop.f32.mrb[0].mxu0
          %v1174 = vadd.f32 0.0, %v1173
          %v1175 = vpop.f32.mrb[0].mxu0
          %1176 = vmatprep.mubr.bf16.mxu0 0
          %1177 = vmatmul.mubr.bf16.gmra.mrb[0].mxu0 %v1043
          %v1178 = vpop.f32.mrb[0].mxu0
          %v1179 = vadd.f32 0.0, %v1178
          %v1180 = vpop.f32.mrb[0].mxu0
          %v1181 = vpop.f32.mrb[0].mxu0
          %v1182 = vadd.f32 0.0, %v1181
          %v1183 = vpop.f32.mrb[0].mxu0
          %1184 = vmatprep.mubr.bf16.mxu0 0
          %1185 = vmatmul.mubr.bf16.gmra.mrb[0].mxu0 %v1044
          %v1186 = vpop.f32.mrb[0].mxu0
          %v1187 = vadd.f32 0.0, %v1186
          %v1188 = vpop.f32.mrb[0].mxu0
          %v1189 = vpop.f32.mrb[0].mxu0
          %v1190 = vadd.f32 0.0, %v1189
          %v1191 = vpop.f32.mrb[0].mxu0
          %1192 = vmatprep.mubr.bf16.mxu0 0
          %1193 = vmatmul.mubr.bf16.gmra.mrb[0].mxu0 %v1045
          %v1194 = vpop.f32.mrb[0].mxu0
          %v1195 = vadd.f32 0.0, %v1194
          %v1196 = vpop.f32.mrb[0].mxu0
          %v1197 = vpop.f32.mrb[0].mxu0
          %v1198 = vadd.f32 0.0, %v1197
          %v1199 = vpop.f32.mrb[0].mxu0
          %1200 = vmatprep.mubr.bf16.mxu0 0
          %1201 = vmatmul.mubr.bf16.gmra.mrb[0].mxu0 %v1046
          %v1202 = vpop.f32.mrb[0].mxu0
          %v1203 = vadd.f32 0.0, %v1202
          %v1204 = vpop.f32.mrb[0].mxu0
          %v1205 = vpop.f32.mrb[0].mxu0
          %v1206 = vadd.f32 0.0, %v1205
          %v1207 = vpop.f32.mrb[0].mxu0
          %1208 = vmatprep.mubr.bf16.mxu0 0
          %1209 = vmatmul.mubr.bf16.gmra.mrb[0].mxu0 %v1047
          %v1210 = vpop.f32.mrb[0].mxu0
          %v1211 = vadd.f32 0.0, %v1210
          %v1212 = vpop.f32.mrb[0].mxu0
          %v1213 = vpop.f32.mrb[0].mxu0
          %v1214 = vadd.f32 0.0, %v1213
          %v1215 = vpop.f32.mrb[0].mxu0
          %1216 = vmatprep.mubr.bf16.mxu0 0
          %1217 = vmatmul.mubr.bf16.gmra.mrb[0].mxu0 %v1048
          %v1218 = vpop.f32.mrb[0].mxu0
          %v1219 = vadd.f32 0.0, %v1218
          %v1220 = vpop.f32.mrb[0].mxu0
          %v1221 = vpop.f32.mrb[0].mxu0
          %v1222 = vadd.f32 0.0, %v1221
          %v1223 = vpop.f32.mrb[0].mxu0
          %1224 = vmatprep.mubr.bf16.mxu0 0
          %1225 = vmatmul.mubr.bf16.gmra.mrb[0].mxu0 %v1049
          %v1226 = vpop.f32.mrb[0].mxu0
          %v1227 = vadd.f32 0.0, %v1226
          %v1228 = vpop.f32.mrb[0].mxu0
          %v1229 = vpop.f32.mrb[0].mxu0
          %v1230 = vadd.f32 0.0, %v1229
          %v1231 = vpop.f32.mrb[0].mxu0
          %1232 = vmatprep.mubr.bf16.mxu0 0
          %1233 = vmatmul.mubr.bf16.gmra.mrb[0].mxu0 %v1050
          %v1234 = vpop.f32.mrb[0].mxu0
          %v1235 = vadd.f32 0.0, %v1234
          %v1236 = vpop.f32.mrb[0].mxu0
          %v1237 = vpop.f32.mrb[0].mxu0
          %v1238 = vadd.f32 0.0, %v1237
          %v1239 = vpop.f32.mrb[0].mxu0
          %1240 = vmatprep.mubr.bf16.mxu0 0
          %1241 = vmatmul.mubr.bf16.gmra.mrb[0].mxu0 %v1051
          %v1242 = vpop.f32.mrb[0].mxu0
          %v1243 = vadd.f32 0.0, %v1242
          %v1244 = vpop.f32.mrb[0].mxu0
          %v1245 = vpop.f32.mrb[0].mxu0
          %v1246 = vadd.f32 0.0, %v1245
          %v1247 = vpop.f32.mrb[0].mxu0
          %1248 = vmatprep.mubr.bf16.mxu0 0
          %1249 = vmatmul.mubr.bf16.gmra.mrb[0].mxu0 %v1052
          %v1250 = vpop.f32.mrb[0].mxu0
          %v1251 = vadd.f32 0.0, %v1250
          %v1252 = vpop.f32.mrb[0].mxu0
          %v1253 = vpop.f32.mrb[0].mxu0
          %v1254 = vadd.f32 0.0, %v1253
          %v1255 = vpop.f32.mrb[0].mxu0
          %1256 = vmatprep.mubr.bf16.mxu0 0
          %1257 = vmatmul.mubr.bf16.gmra.mrb[0].mxu0 %v1053
          %v1258 = vpop.f32.mrb[0].mxu0
          %v1259 = vadd.f32 0.0, %v1258
          %v1260 = vpop.f32.mrb[0].mxu0
          %v1261 = vpop.f32.mrb[0].mxu0
          %v1262 = vadd.f32 0.0, %v1261
          %v1263 = vpop.f32.mrb[0].mxu0
          %1264 = vmatprep.mubr.bf16.mxu0 0
          %1265 = vmatmul.mubr.bf16.gmra.mrb[0].mxu0 %v1054
          %v1266 = vpop.f32.mrb[0].mxu0
          %v1267 = vadd.f32 0.0, %v1266
          %v1268 = vpop.f32.mrb[0].mxu0
          %v1269 = vpop.f32.mrb[0].mxu0
          %v1270 = vadd.f32 0.0, %v1269
          %v1271 = vpop.f32.mrb[0].mxu0
          %1272 = vmatprep.mubr.bf16.mxu0 0
          %1273 = vmatmul.mubr.bf16.gmra.mrb[0].mxu0 %v1055
          %v1274 = vpop.f32.mrb[0].mxu0
          %v1275 = vadd.f32 0.0, %v1274
          %v1276 = vpop.f32.mrb[0].mxu0
          %v1277 = vpop.f32.mrb[0].mxu0
          %v1278 = vadd.f32 0.0, %v1277
          %v1279 = vpop.f32.mrb[0].mxu0
          %1280 = vdwg.mxu0
          %v1281 = vmax.f32 %v1155, 0.0
          %v1282 = vmax.f32 %v1158, 0.0
          %v1283 = vmax.f32 %v1163, 0.0
          %v1284 = vmax.f32 %v1166, 0.0
          %v1285 = vmax.f32 %v1171, 0.0
          %v1286 = vmax.f32 %v1174, 0.0
          %v1287 = vmax.f32 %v1179, 0.0
          %v1288 = vmax.f32 %v1182, 0.0
          %v1289 = vmax.f32 %v1187, 0.0
          %v1290 = vmax.f32 %v1190, 0.0
          %v1291 = vmax.f32 %v1195, 0.0
          %v1292 = vmax.f32 %v1198, 0.0
          %v1293 = vmax.f32 %v1203, 0.0
          %v1294 = vmax.f32 %v1206, 0.0
          %v1295 = vmax.f32 %v1211, 0.0
          %v1296 = vmax.f32 %v1214, 0.0
          %v1297 = vmax.f32 %v1219, 0.0
          %v1298 = vmax.f32 %v1222, 0.0
          %v1299 = vmax.f32 %v1227, 0.0
          %v1300 = vmax.f32 %v1230, 0.0
          %v1301 = vmax.f32 %v1235, 0.0
          %v1302 = vmax.f32 %v1238, 0.0
          %v1303 = vmax.f32 %v1243, 0.0
          %v1304 = vmax.f32 %v1246, 0.0
          %v1305 = vmax.f32 %v1251, 0.0
          %v1306 = vmax.f32 %v1254, 0.0
          %v1307 = vmax.f32 %v1259, 0.0
          %v1308 = vmax.f32 %v1262, 0.0
          %v1309 = vmax.f32 %v1267, 0.0
          %v1310 = vmax.f32 %v1270, 0.0
          %v1311 = vmax.f32 %v1275, 0.0
          %v1312 = vmax.f32 %v1278, 0.0
          %v1313 = vpack.c.bf16 %v1282, %v1281
          %v1314 = vpack.c.bf16 %v1284, %v1283
          %v1315 = vpack.c.bf16 %v1286, %v1285
          %v1316 = vpack.c.bf16 %v1288, %v1287
          %v1317 = vpack.c.bf16 %v1290, %v1289
          %v1318 = vpack.c.bf16 %v1292, %v1291
          %v1319 = vpack.c.bf16 %v1294, %v1293
          %v1320 = vpack.c.bf16 %v1296, %v1295
          %v1321 = vpack.c.bf16 %v1298, %v1297
          %v1322 = vpack.c.bf16 %v1300, %v1299
          %v1323 = vpack.c.bf16 %v1302, %v1301
          %v1324 = vpack.c.bf16 %v1304, %v1303
          %v1325 = vpack.c.bf16 %v1306, %v1305
          %v1326 = vpack.c.bf16 %v1308, %v1307
          %v1327 = vpack.c.bf16 %v1310, %v1309
          %v1328 = vpack.c.bf16 %v1312, %v1311
          %v1329 = vld [vmem:[#allocation12] sm:$0xf]
          %v1330 = vld [vmem:[#allocation12 + $0x4] sm:$0xf]
          %v1331 = vld [vmem:[#allocation12 + $0x8] sm:$0xf]
          %v1332 = vld [vmem:[#allocation12 + $0xc] sm:$0xf]
          %v1333 = vld [vmem:[#allocation12 + $0x10] sm:$0xf]
          %v1334 = vld [vmem:[#allocation12 + $0x14] sm:$0xf]
          %v1335 = vld [vmem:[#allocation12 + $0x18] sm:$0xf]
          %v1336 = vld [vmem:[#allocation12 + $0x1c] sm:$0xf]
          %v1337 = vld [vmem:[#allocation12 + $0x20] sm:$0xf]
          %v1338 = vld [vmem:[#allocation12 + $0x24] sm:$0xf]
          %v1339 = vld [vmem:[#allocation12 + $0x28] sm:$0xf]
          %v1340 = vld [vmem:[#allocation12 + $0x2c] sm:$0xf]
          %v1341 = vld [vmem:[#allocation12 + $0x30] sm:$0xf]
          %v1342 = vld [vmem:[#allocation12 + $0x34] sm:$0xf]
          %v1343 = vld [vmem:[#allocation12 + $0x38] sm:$0xf]
          %v1344 = vld [vmem:[#allocation12 + $0x3c] sm:$0xf]
          %v1345 = vld [vmem:[%s5] sm:$0x1]
          %v1347 = vlaneseq
          %v1348 = vshrl.u32 %v1347, 7
          %v1349 = vsub.s32 0, %v1348
          %v1350 = vrot.slane %v1345, %v1349
          %v1368 = vunpack.c.l.b16 %v1329
          %v1369 = vunpack.c.l.b16 %v1330
          %v1370 = vunpack.c.l.b16 %v1331
          %v1371 = vunpack.c.l.b16 %v1332
          %v1372 = vunpack.c.l.b16 %v1333
          %v1373 = vunpack.c.l.b16 %v1334
          %v1374 = vunpack.c.l.b16 %v1335
          %v1375 = vunpack.c.l.b16 %v1336
          %v1376 = vunpack.c.l.b16 %v1337
          %v1377 = vunpack.c.l.b16 %v1338
          %v1378 = vunpack.c.l.b16 %v1339
          %v1379 = vunpack.c.l.b16 %v1340
          %v1380 = vunpack.c.l.b16 %v1341
          %v1381 = vunpack.c.l.b16 %v1342
          %v1382 = vunpack.c.l.b16 %v1343
          %v1383 = vunpack.c.l.b16 %v1344
          %v1384 = vpack.c.b16 %v1369, %v1368
          %v1385 = vpack.c.b16 %v1371, %v1370
          %v1386 = vpack.c.b16 %v1373, %v1372
          %v1387 = vpack.c.b16 %v1375, %v1374
          %v1388 = vpack.c.b16 %v1377, %v1376
          %v1389 = vpack.c.b16 %v1379, %v1378
          %v1390 = vpack.c.b16 %v1381, %v1380
          %v1391 = vpack.c.b16 %v1383, %v1382
          %1400 = vmatprep.subr.bf16.mxu0 0
          %1401 = vmatpush1.bf16.msra.mxu0 %v1384
          %1402 = vmatprep.subr.bf16.mxu0 0
          %1403 = vmatpush1.bf16.msra.mxu0 %v1385
          %1404 = vmatprep.subr.bf16.mxu0 0
          %1405 = vmatpush1.bf16.msra.mxu0 %v1386
          %1406 = vmatprep.subr.bf16.mxu0 0
          %1407 = vmatpush1.bf16.msra.mxu0 %v1387
          %1408 = vmatprep.subr.bf16.mxu0 0
          %1409 = vmatpush1.bf16.msra.mxu0 %v1388
          %1410 = vmatprep.subr.bf16.mxu0 0
          %1411 = vmatpush1.bf16.msra.mxu0 %v1389
          %1412 = vmatprep.subr.bf16.mxu0 0
          %1413 = vmatpush1.bf16.msra.mxu0 %v1390
          %1414 = vmatprep.subr.bf16.mxu0 0
          %1415 = vmatpush1.bf16.msra.mxu0 %v1391
          %1416 = vmatprep.subr.bf16.mxu0 0
          %1417 = vmatpush1.bf16.msra.mxu0 0
          %1418 = vmatprep.subr.bf16.mxu0 0
          %1419 = vmatpush1.bf16.msra.mxu0 0
          %1420 = vmatprep.subr.bf16.mxu0 0
          %1421 = vmatpush1.bf16.msra.mxu0 0
          %1422 = vmatprep.subr.bf16.mxu0 0
          %1423 = vmatpush1.bf16.msra.mxu0 0
          %1424 = vmatprep.subr.bf16.mxu0 0
          %1425 = vmatpush1.bf16.msra.mxu0 0
          %1426 = vmatprep.subr.bf16.mxu0 0
          %1427 = vmatpush1.bf16.msra.mxu0 0
          %1428 = vmatprep.subr.bf16.mxu0 0
          %1429 = vmatpush1.bf16.msra.mxu0 0
          %1430 = vmatprep.subr.bf16.mxu0 0
          %1431 = vmatpush1.bf16.msra.mxu0 0
          %1432 = vmatprep.mubr.bf16.mxu0 0
          %1433 = vmatmul.mubr.bf16.gmra.mrb[0].mxu0 %v1313
          %v1434 = vpop.f32.mrb[0].mxu0
          %v1435 = vadd.f32 %v1350, %v1434
          %v1436 = vpop.f32.mrb[0].mxu0
          %v1437 = vpop.f32.mrb[0].mxu0
          %v1438 = vadd.f32 %v1350, %v1437
          %v1439 = vpop.f32.mrb[0].mxu0
          %1440 = vmatprep.mubr.bf16.mxu0 0
          %1441 = vmatmul.mubr.bf16.gmra.mrb[0].mxu0 %v1314
          %v1442 = vpop.f32.mrb[0].mxu0
          %v1443 = vadd.f32 %v1350, %v1442
          %v1444 = vpop.f32.mrb[0].mxu0
          %v1445 = vpop.f32.mrb[0].mxu0
          %v1446 = vadd.f32 %v1350, %v1445
          %v1447 = vpop.f32.mrb[0].mxu0
          %1448 = vmatprep.mubr.bf16.mxu0 0
          %1449 = vmatmul.mubr.bf16.gmra.mrb[0].mxu0 %v1315
          %v1450 = vpop.f32.mrb[0].mxu0
          %v1451 = vadd.f32 %v1350, %v1450
          %v1452 = vpop.f32.mrb[0].mxu0
          %v1453 = vpop.f32.mrb[0].mxu0
          %v1454 = vadd.f32 %v1350, %v1453
          %v1455 = vpop.f32.mrb[0].mxu0
          %1456 = vmatprep.mubr.bf16.mxu0 0
          %1457 = vmatmul.mubr.bf16.gmra.mrb[0].mxu0 %v1316
          %v1458 = vpop.f32.mrb[0].mxu0
          %v1459 = vadd.f32 %v1350, %v1458
          %v1460 = vpop.f32.mrb[0].mxu0
          %v1461 = vpop.f32.mrb[0].mxu0
          %v1462 = vadd.f32 %v1350, %v1461
          %v1463 = vpop.f32.mrb[0].mxu0
          %1464 = vmatprep.mubr.bf16.mxu0 0
          %1465 = vmatmul.mubr.bf16.gmra.mrb[0].mxu0 %v1317
          %v1466 = vpop.f32.mrb[0].mxu0
          %v1467 = vadd.f32 %v1350, %v1466
          %v1468 = vpop.f32.mrb[0].mxu0
          %v1469 = vpop.f32.mrb[0].mxu0
          %v1470 = vadd.f32 %v1350, %v1469
          %v1471 = vpop.f32.mrb[0].mxu0
          %1472 = vmatprep.mubr.bf16.mxu0 0
          %1473 = vmatmul.mubr.bf16.gmra.mrb[0].mxu0 %v1318
          %v1474 = vpop.f32.mrb[0].mxu0
          %v1475 = vadd.f32 %v1350, %v1474
          %v1476 = vpop.f32.mrb[0].mxu0
          %v1477 = vpop.f32.mrb[0].mxu0
          %v1478 = vadd.f32 %v1350, %v1477
          %v1479 = vpop.f32.mrb[0].mxu0
          %1480 = vmatprep.mubr.bf16.mxu0 0
          %1481 = vmatmul.mubr.bf16.gmra.mrb[0].mxu0 %v1319
          %v1482 = vpop.f32.mrb[0].mxu0
          %v1483 = vadd.f32 %v1350, %v1482
          %v1484 = vpop.f32.mrb[0].mxu0
          %v1485 = vpop.f32.mrb[0].mxu0
          %v1486 = vadd.f32 %v1350, %v1485
          %v1487 = vpop.f32.mrb[0].mxu0
          %1488 = vmatprep.mubr.bf16.mxu0 0
          %1489 = vmatmul.mubr.bf16.gmra.mrb[0].mxu0 %v1320
          %v1490 = vpop.f32.mrb[0].mxu0
          %v1491 = vadd.f32 %v1350, %v1490
          %v1492 = vpop.f32.mrb[0].mxu0
          %v1493 = vpop.f32.mrb[0].mxu0
          %v1494 = vadd.f32 %v1350, %v1493
          %v1495 = vpop.f32.mrb[0].mxu0
          %1496 = vmatprep.mubr.bf16.mxu0 0
          %1497 = vmatmul.mubr.bf16.gmra.mrb[0].mxu0 %v1321
          %v1498 = vpop.f32.mrb[0].mxu0
          %v1499 = vadd.f32 %v1350, %v1498
          %v1500 = vpop.f32.mrb[0].mxu0
          %v1501 = vpop.f32.mrb[0].mxu0
          %v1502 = vadd.f32 %v1350, %v1501
          %v1503 = vpop.f32.mrb[0].mxu0
          %1504 = vmatprep.mubr.bf16.mxu0 0
          %1505 = vmatmul.mubr.bf16.gmra.mrb[0].mxu0 %v1322
          %v1506 = vpop.f32.mrb[0].mxu0
          %v1507 = vadd.f32 %v1350, %v1506
          %v1508 = vpop.f32.mrb[0].mxu0
          %v1509 = vpop.f32.mrb[0].mxu0
          %v1510 = vadd.f32 %v1350, %v1509
          %v1511 = vpop.f32.mrb[0].mxu0
          %1512 = vmatprep.mubr.bf16.mxu0 0
          %1513 = vmatmul.mubr.bf16.gmra.mrb[0].mxu0 %v1323
          %v1514 = vpop.f32.mrb[0].mxu0
          %v1515 = vadd.f32 %v1350, %v1514
          %v1516 = vpop.f32.mrb[0].mxu0
          %v1517 = vpop.f32.mrb[0].mxu0
          %v1518 = vadd.f32 %v1350, %v1517
          %v1519 = vpop.f32.mrb[0].mxu0
          %1520 = vmatprep.mubr.bf16.mxu0 0
          %1521 = vmatmul.mubr.bf16.gmra.mrb[0].mxu0 %v1324
          %v1522 = vpop.f32.mrb[0].mxu0
          %v1523 = vadd.f32 %v1350, %v1522
          %v1524 = vpop.f32.mrb[0].mxu0
          %v1525 = vpop.f32.mrb[0].mxu0
          %v1526 = vadd.f32 %v1350, %v1525
          %v1527 = vpop.f32.mrb[0].mxu0
          %1528 = vmatprep.mubr.bf16.mxu0 0
          %1529 = vmatmul.mubr.bf16.gmra.mrb[0].mxu0 %v1325
          %v1530 = vpop.f32.mrb[0].mxu0
          %v1531 = vadd.f32 %v1350, %v1530
          %v1532 = vpop.f32.mrb[0].mxu0
          %v1533 = vpop.f32.mrb[0].mxu0
          %v1534 = vadd.f32 %v1350, %v1533
          %v1535 = vpop.f32.mrb[0].mxu0
          %1536 = vmatprep.mubr.bf16.mxu0 0
          %1537 = vmatmul.mubr.bf16.gmra.mrb[0].mxu0 %v1326
          %v1538 = vpop.f32.mrb[0].mxu0
          %v1539 = vadd.f32 %v1350, %v1538
          %v1540 = vpop.f32.mrb[0].mxu0
          %v1541 = vpop.f32.mrb[0].mxu0
          %v1542 = vadd.f32 %v1350, %v1541
          %v1543 = vpop.f32.mrb[0].mxu0
          %1544 = vmatprep.mubr.bf16.mxu0 0
          %1545 = vmatmul.mubr.bf16.gmra.mrb[0].mxu0 %v1327
          %v1546 = vpop.f32.mrb[0].mxu0
          %v1547 = vadd.f32 %v1350, %v1546
          %v1548 = vpop.f32.mrb[0].mxu0
          %v1549 = vpop.f32.mrb[0].mxu0
          %v1550 = vadd.f32 %v1350, %v1549
          %v1551 = vpop.f32.mrb[0].mxu0
          %1552 = vmatprep.mubr.bf16.mxu0 0
          %1553 = vmatmul.mubr.bf16.gmra.mrb[0].mxu0 %v1328
          %v1554 = vpop.f32.mrb[0].mxu0
          %v1555 = vadd.f32 %v1350, %v1554
          %v1556 = vpop.f32.mrb[0].mxu0
          %v1557 = vpop.f32.mrb[0].mxu0
          %v1558 = vadd.f32 %v1350, %v1557
          %v1559 = vpop.f32.mrb[0].mxu0
          %1560 = vdwg.mxu0
          %v1561 = vmax.f32 %v1435, 0.0
          %v1562 = vmax.f32 %v1438, 0.0
          %v1563 = vmax.f32 %v1443, 0.0
          %v1564 = vmax.f32 %v1446, 0.0
          %v1565 = vmax.f32 %v1451, 0.0
          %v1566 = vmax.f32 %v1454, 0.0
          %v1567 = vmax.f32 %v1459, 0.0
          %v1568 = vmax.f32 %v1462, 0.0
          %v1569 = vmax.f32 %v1467, 0.0
          %v1570 = vmax.f32 %v1470, 0.0
          %v1571 = vmax.f32 %v1475, 0.0
          %v1572 = vmax.f32 %v1478, 0.0
          %v1573 = vmax.f32 %v1483, 0.0
          %v1574 = vmax.f32 %v1486, 0.0
          %v1575 = vmax.f32 %v1491, 0.0
          %v1576 = vmax.f32 %v1494, 0.0
          %v1577 = vmax.f32 %v1499, 0.0
          %v1578 = vmax.f32 %v1502, 0.0
          %v1579 = vmax.f32 %v1507, 0.0
          %v1580 = vmax.f32 %v1510, 0.0
          %v1581 = vmax.f32 %v1515, 0.0
          %v1582 = vmax.f32 %v1518, 0.0
          %v1583 = vmax.f32 %v1523, 0.0
          %v1584 = vmax.f32 %v1526, 0.0
          %v1585 = vmax.f32 %v1531, 0.0
          %v1586 = vmax.f32 %v1534, 0.0
          %v1587 = vmax.f32 %v1539, 0.0
          %v1588 = vmax.f32 %v1542, 0.0
          %v1589 = vmax.f32 %v1547, 0.0
          %v1590 = vmax.f32 %v1550, 0.0
          %v1591 = vmax.f32 %v1555, 0.0
          %v1592 = vmax.f32 %v1558, 0.0
          %v1593 = vpack.c.bf16 %v1562, %v1561
          %v1594 = vpack.c.bf16 %v1564, %v1563
          %v1595 = vpack.c.bf16 %v1566, %v1565
          %v1596 = vpack.c.bf16 %v1568, %v1567
          %v1597 = vpack.c.bf16 %v1570, %v1569
          %v1598 = vpack.c.bf16 %v1572, %v1571
          %v1599 = vpack.c.bf16 %v1574, %v1573
          %v1600 = vpack.c.bf16 %v1576, %v1575
          %v1601 = vpack.c.bf16 %v1578, %v1577
          %v1602 = vpack.c.bf16 %v1580, %v1579
          %v1603 = vpack.c.bf16 %v1582, %v1581
          %v1604 = vpack.c.bf16 %v1584, %v1583
          %v1605 = vpack.c.bf16 %v1586, %v1585
          %v1606 = vpack.c.bf16 %v1588, %v1587
          %v1607 = vpack.c.bf16 %v1590, %v1589
          %v1608 = vpack.c.bf16 %v1592, %v1591
          %v1609 = vld [vmem:[#allocation14] sm:$0xf]
          %v1610 = vld [vmem:[#allocation14 + $0x4] sm:$0xf]
          %v1611 = vld [vmem:[#allocation14 + $0x8] sm:$0xf]
          %v1612 = vld [vmem:[#allocation14 + $0xc] sm:$0xf]
          %v1613 = vld [vmem:[#allocation14 + $0x10] sm:$0xf]
          %v1614 = vld [vmem:[#allocation14 + $0x14] sm:$0xf]
          %v1615 = vld [vmem:[#allocation14 + $0x18] sm:$0xf]
          %v1616 = vld [vmem:[#allocation14 + $0x1c] sm:$0xf]
          %v1617 = vld [vmem:[#allocation14 + $0x20] sm:$0xf]
          %v1618 = vld [vmem:[#allocation14 + $0x24] sm:$0xf]
          %v1619 = vld [vmem:[#allocation14 + $0x28] sm:$0xf]
          %v1620 = vld [vmem:[#allocation14 + $0x2c] sm:$0xf]
          %v1621 = vld [vmem:[#allocation14 + $0x30] sm:$0xf]
          %v1622 = vld [vmem:[#allocation14 + $0x34] sm:$0xf]
          %v1623 = vld [vmem:[#allocation14 + $0x38] sm:$0xf]
          %v1624 = vld [vmem:[#allocation14 + $0x3c] sm:$0xf]
          %v1625 = vld [vmem:[%s7] sm:$0x1]
          %v1627 = vlaneseq
          %v1628 = vshrl.u32 %v1627, 7
          %v1629 = vsub.s32 0, %v1628
          %v1630 = vrot.slane %v1625, %v1629
          %v1648 = vunpack.c.l.b16 %v1609
          %v1649 = vunpack.c.l.b16 %v1610
          %v1650 = vunpack.c.l.b16 %v1611
          %v1651 = vunpack.c.l.b16 %v1612
          %v1652 = vunpack.c.l.b16 %v1613
          %v1653 = vunpack.c.l.b16 %v1614
          %v1654 = vunpack.c.l.b16 %v1615
          %v1655 = vunpack.c.l.b16 %v1616
          %v1656 = vunpack.c.l.b16 %v1617
          %v1657 = vunpack.c.l.b16 %v1618
          %v1658 = vunpack.c.l.b16 %v1619
          %v1659 = vunpack.c.l.b16 %v1620
          %v1660 = vunpack.c.l.b16 %v1621
          %v1661 = vunpack.c.l.b16 %v1622
          %v1662 = vunpack.c.l.b16 %v1623
          %v1663 = vunpack.c.l.b16 %v1624
          %v1664 = vpack.c.b16 %v1649, %v1648
          %v1665 = vpack.c.b16 %v1651, %v1650
          %v1666 = vpack.c.b16 %v1653, %v1652
          %v1667 = vpack.c.b16 %v1655, %v1654
          %v1668 = vpack.c.b16 %v1657, %v1656
          %v1669 = vpack.c.b16 %v1659, %v1658
          %v1670 = vpack.c.b16 %v1661, %v1660
          %v1671 = vpack.c.b16 %v1663, %v1662
          %1680 = vmatprep.subr.bf16.mxu0 0
          %1681 = vmatpush1.bf16.msra.mxu0 %v1664
          %1682 = vmatprep.subr.bf16.mxu0 0
          %1683 = vmatpush1.bf16.msra.mxu0 %v1665
          %1684 = vmatprep.subr.bf16.mxu0 0
          %1685 = vmatpush1.bf16.msra.mxu0 %v1666
          %1686 = vmatprep.subr.bf16.mxu0 0
          %1687 = vmatpush1.bf16.msra.mxu0 %v1667
          %1688 = vmatprep.subr.bf16.mxu0 0
          %1689 = vmatpush1.bf16.msra.mxu0 %v1668
          %1690 = vmatprep.subr.bf16.mxu0 0
          %1691 = vmatpush1.bf16.msra.mxu0 %v1669
          %1692 = vmatprep.subr.bf16.mxu0 0
          %1693 = vmatpush1.bf16.msra.mxu0 %v1670
          %1694 = vmatprep.subr.bf16.mxu0 0
          %1695 = vmatpush1.bf16.msra.mxu0 %v1671
          %1696 = vmatprep.subr.bf16.mxu0 0
          %1697 = vmatpush1.bf16.msra.mxu0 0
          %1698 = vmatprep.subr.bf16.mxu0 0
          %1699 = vmatpush1.bf16.msra.mxu0 0
          %1700 = vmatprep.subr.bf16.mxu0 0
          %1701 = vmatpush1.bf16.msra.mxu0 0
          %1702 = vmatprep.subr.bf16.mxu0 0
          %1703 = vmatpush1.bf16.msra.mxu0 0
          %1704 = vmatprep.subr.bf16.mxu0 0
          %1705 = vmatpush1.bf16.msra.mxu0 0
          %1706 = vmatprep.subr.bf16.mxu0 0
          %1707 = vmatpush1.bf16.msra.mxu0 0
          %1708 = vmatprep.subr.bf16.mxu0 0
          %1709 = vmatpush1.bf16.msra.mxu0 0
          %1710 = vmatprep.subr.bf16.mxu0 0
          %1711 = vmatpush1.bf16.msra.mxu0 0
          %1712 = vmatprep.mubr.bf16.mxu0 0
          %1713 = vmatmul.mubr.bf16.gmra.mrb[0].mxu0 %v1593
          %v1714 = vpop.f32.mrb[0].mxu0
          %v1715 = vadd.f32 %v1630, %v1714
          %v1716 = vpop.f32.mrb[0].mxu0
          %v1717 = vpop.f32.mrb[0].mxu0
          %v1718 = vadd.f32 %v1630, %v1717
          %v1719 = vpop.f32.mrb[0].mxu0
          %1720 = vmatprep.mubr.bf16.mxu0 0
          %1721 = vmatmul.mubr.bf16.gmra.mrb[0].mxu0 %v1594
          %v1722 = vpop.f32.mrb[0].mxu0
          %v1723 = vadd.f32 %v1630, %v1722
          %v1724 = vpop.f32.mrb[0].mxu0
          %v1725 = vpop.f32.mrb[0].mxu0
          %v1726 = vadd.f32 %v1630, %v1725
          %v1727 = vpop.f32.mrb[0].mxu0
          %1728 = vmatprep.mubr.bf16.mxu0 0
          %1729 = vmatmul.mubr.bf16.gmra.mrb[0].mxu0 %v1595
          %v1730 = vpop.f32.mrb[0].mxu0
          %v1731 = vadd.f32 %v1630, %v1730
          %v1732 = vpop.f32.mrb[0].mxu0
          %v1733 = vpop.f32.mrb[0].mxu0
          %v1734 = vadd.f32 %v1630, %v1733
          %v1735 = vpop.f32.mrb[0].mxu0
          %1736 = vmatprep.mubr.bf16.mxu0 0
          %1737 = vmatmul.mubr.bf16.gmra.mrb[0].mxu0 %v1596
          %v1738 = vpop.f32.mrb[0].mxu0
          %v1739 = vadd.f32 %v1630, %v1738
          %v1740 = vpop.f32.mrb[0].mxu0
          %v1741 = vpop.f32.mrb[0].mxu0
          %v1742 = vadd.f32 %v1630, %v1741
          %v1743 = vpop.f32.mrb[0].mxu0
          %1744 = vmatprep.mubr.bf16.mxu0 0
          %1745 = vmatmul.mubr.bf16.gmra.mrb[0].mxu0 %v1597
          %v1746 = vpop.f32.mrb[0].mxu0
          %v1747 = vadd.f32 %v1630, %v1746
          %v1748 = vpop.f32.mrb[0].mxu0
          %v1749 = vpop.f32.mrb[0].mxu0
          %v1750 = vadd.f32 %v1630, %v1749
          %v1751 = vpop.f32.mrb[0].mxu0
          %1752 = vmatprep.mubr.bf16.mxu0 0
          %1753 = vmatmul.mubr.bf16.gmra.mrb[0].mxu0 %v1598
          %v1754 = vpop.f32.mrb[0].mxu0
          %v1755 = vadd.f32 %v1630, %v1754
          %v1756 = vpop.f32.mrb[0].mxu0
          %v1757 = vpop.f32.mrb[0].mxu0
          %v1758 = vadd.f32 %v1630, %v1757
          %v1759 = vpop.f32.mrb[0].mxu0
          %1760 = vmatprep.mubr.bf16.mxu0 0
          %1761 = vmatmul.mubr.bf16.gmra.mrb[0].mxu0 %v1599
          %v1762 = vpop.f32.mrb[0].mxu0
          %v1763 = vadd.f32 %v1630, %v1762
          %v1764 = vpop.f32.mrb[0].mxu0
          %v1765 = vpop.f32.mrb[0].mxu0
          %v1766 = vadd.f32 %v1630, %v1765
          %v1767 = vpop.f32.mrb[0].mxu0
          %1768 = vmatprep.mubr.bf16.mxu0 0
          %1769 = vmatmul.mubr.bf16.gmra.mrb[0].mxu0 %v1600
          %v1770 = vpop.f32.mrb[0].mxu0
          %v1771 = vadd.f32 %v1630, %v1770
          %v1772 = vpop.f32.mrb[0].mxu0
          %v1773 = vpop.f32.mrb[0].mxu0
          %v1774 = vadd.f32 %v1630, %v1773
          %v1775 = vpop.f32.mrb[0].mxu0
          %1776 = vmatprep.mubr.bf16.mxu0 0
          %1777 = vmatmul.mubr.bf16.gmra.mrb[0].mxu0 %v1601
          %v1778 = vpop.f32.mrb[0].mxu0
          %v1779 = vadd.f32 %v1630, %v1778
          %v1780 = vpop.f32.mrb[0].mxu0
          %v1781 = vpop.f32.mrb[0].mxu0
          %v1782 = vadd.f32 %v1630, %v1781
          %v1783 = vpop.f32.mrb[0].mxu0
          %1784 = vmatprep.mubr.bf16.mxu0 0
          %1785 = vmatmul.mubr.bf16.gmra.mrb[0].mxu0 %v1602
          %v1786 = vpop.f32.mrb[0].mxu0
          %v1787 = vadd.f32 %v1630, %v1786
          %v1788 = vpop.f32.mrb[0].mxu0
          %v1789 = vpop.f32.mrb[0].mxu0
          %v1790 = vadd.f32 %v1630, %v1789
          %v1791 = vpop.f32.mrb[0].mxu0
          %1792 = vmatprep.mubr.bf16.mxu0 0
          %1793 = vmatmul.mubr.bf16.gmra.mrb[0].mxu0 %v1603
          %v1794 = vpop.f32.mrb[0].mxu0
          %v1795 = vadd.f32 %v1630, %v1794
          %v1796 = vpop.f32.mrb[0].mxu0
          %v1797 = vpop.f32.mrb[0].mxu0
          %v1798 = vadd.f32 %v1630, %v1797
          %v1799 = vpop.f32.mrb[0].mxu0
          %1800 = vmatprep.mubr.bf16.mxu0 0
          %1801 = vmatmul.mubr.bf16.gmra.mrb[0].mxu0 %v1604
          %v1802 = vpop.f32.mrb[0].mxu0
          %v1803 = vadd.f32 %v1630, %v1802
          %v1804 = vpop.f32.mrb[0].mxu0
          %v1805 = vpop.f32.mrb[0].mxu0
          %v1806 = vadd.f32 %v1630, %v1805
          %v1807 = vpop.f32.mrb[0].mxu0
          %1808 = vmatprep.mubr.bf16.mxu0 0
          %1809 = vmatmul.mubr.bf16.gmra.mrb[0].mxu0 %v1605
          %v1810 = vpop.f32.mrb[0].mxu0
          %v1811 = vadd.f32 %v1630, %v1810
          %v1812 = vpop.f32.mrb[0].mxu0
          %v1813 = vpop.f32.mrb[0].mxu0
          %v1814 = vadd.f32 %v1630, %v1813
          %v1815 = vpop.f32.mrb[0].mxu0
          %1816 = vmatprep.mubr.bf16.mxu0 0
          %1817 = vmatmul.mubr.bf16.gmra.mrb[0].mxu0 %v1606
          %v1818 = vpop.f32.mrb[0].mxu0
          %v1819 = vadd.f32 %v1630, %v1818
          %v1820 = vpop.f32.mrb[0].mxu0
          %v1821 = vpop.f32.mrb[0].mxu0
          %v1822 = vadd.f32 %v1630, %v1821
          %v1823 = vpop.f32.mrb[0].mxu0
          %1824 = vmatprep.mubr.bf16.mxu0 0
          %1825 = vmatmul.mubr.bf16.gmra.mrb[0].mxu0 %v1607
          %v1826 = vpop.f32.mrb[0].mxu0
          %v1827 = vadd.f32 %v1630, %v1826
          %v1828 = vpop.f32.mrb[0].mxu0
          %v1829 = vpop.f32.mrb[0].mxu0
          %v1830 = vadd.f32 %v1630, %v1829
          %v1831 = vpop.f32.mrb[0].mxu0
          %1832 = vmatprep.mubr.bf16.mxu0 0
          %1833 = vmatmul.mubr.bf16.gmra.mrb[0].mxu0 %v1608
          %v1834 = vpop.f32.mrb[0].mxu0
          %v1835 = vadd.f32 %v1630, %v1834
          %v1836 = vpop.f32.mrb[0].mxu0
          %v1837 = vpop.f32.mrb[0].mxu0
          %v1838 = vadd.f32 %v1630, %v1837
          %v1839 = vpop.f32.mrb[0].mxu0
          %1840 = vdwg.mxu0
          %1841 = vst [vmem:[%s346] sm:$0xff] %v1715
          %1842 = vst [vmem:[%s346 + $0x8] sm:$0xff] %v1718
          %1843 = vst [vmem:[%s346 + $0x10] sm:$0xff] %v1723
          %1844 = vst [vmem:[%s346 + $0x18] sm:$0xff] %v1726
          %1845 = vst [vmem:[%s346 + $0x20] sm:$0xff] %v1731
          %1846 = vst [vmem:[%s346 + $0x28] sm:$0xff] %v1734
          %1847 = vst [vmem:[%s346 + $0x30] sm:$0xff] %v1739
          %1848 = vst [vmem:[%s346 + $0x38] sm:$0xff] %v1742
          %1849 = vst [vmem:[%s346 + $0x40] sm:$0xff] %v1747
          %1850 = vst [vmem:[%s346 + $0x48] sm:$0xff] %v1750
          %1851 = vst [vmem:[%s346 + $0x50] sm:$0xff] %v1755
          %1852 = vst [vmem:[%s346 + $0x58] sm:$0xff] %v1758
          %1853 = vst [vmem:[%s346 + $0x60] sm:$0xff] %v1763
          %1854 = vst [vmem:[%s346 + $0x68] sm:$0xff] %v1766
          %1855 = vst [vmem:[%s346 + $0x70] sm:$0xff] %v1771
          %1856 = vst [vmem:[%s346 + $0x78] sm:$0xff] %v1774
          %1857 = vst [vmem:[%s346 + $0x80] sm:$0xff] %v1779
          %1858 = vst [vmem:[%s346 + $0x88] sm:$0xff] %v1782
          %1859 = vst [vmem:[%s346 + $0x90] sm:$0xff] %v1787
          %1860 = vst [vmem:[%s346 + $0x98] sm:$0xff] %v1790
          %1861 = vst [vmem:[%s346 + $0xa0] sm:$0xff] %v1795
          %1862 = vst [vmem:[%s346 + $0xa8] sm:$0xff] %v1798
          %1863 = vst [vmem:[%s346 + $0xb0] sm:$0xff] %v1803
          %1864 = vst [vmem:[%s346 + $0xb8] sm:$0xff] %v1806
          %1865 = vst [vmem:[%s346 + $0xc0] sm:$0xff] %v1811
          %1866 = vst [vmem:[%s346 + $0xc8] sm:$0xff] %v1814
          %1867 = vst [vmem:[%s346 + $0xd0] sm:$0xff] %v1819
          %1868 = vst [vmem:[%s346 + $0xd8] sm:$0xff] %v1822
          %1869 = vst [vmem:[%s346 + $0xe0] sm:$0xff] %v1827
          %1870 = vst [vmem:[%s346 + $0xe8] sm:$0xff] %v1830
          %1871 = vst [vmem:[%s346 + $0xf0] sm:$0xff] %v1835
          %1872 = vst [vmem:[%s346 + $0xf8] sm:$0xff] %v1838
        $region80: #{tpu_custom_call.1} parent=47 // pred_fallthru
          _
        %s1873 = sand.u32 %s196, 1
        %s1874 = scalar_lea.sflag [#allocation8], %s1873
        %s1875 = sand.u32 %s196, 1
        %s1876 = smul.addr %s1875, 256
        %s1877 = scalar_lea.vmem [#allocation15], %s1876
        // Predicated region
        $region81: #{tpu_custom_call.1} parent=47 // pred_check
          %p1878 = pneg %p206
        $region82: #{tpu_custom_call.1} parent=47 // pred_check_branch
          %1880 = sbr.rel (%p1878) target = $region84
        $region83: #{tpu_custom_call.1} parent=47 // pred_region
          %p1881 = scmp.eq.s32.totalorder %s29, 2
          %s1882 = scalar_select %p1881, %s30, 0
          %s1883 = smul.u32 32, %s1882
          %s1885 = ssub.s32 4096, 4096
          %1886 = vsyncadd %s1874, %s1885
          %s1887 = smul.addr %s1883, 128
          %s1888 = scalar_lea.hbm %s8, %s1887
          %s1889 = sshll.u32 %s1877, 4
          %s1890 = int_to_ptr.vmem [resolvable:$true] %s1889
          %1895 = dma.vmem_to_hbm [thread:$0]  %s1890, 4096, %s1888, %s1874, 128, 128, 8
        $region84: #{tpu_custom_call.1} parent=47 // pred_fallthru
          _
      $region48: #{tpu_custom_call.1} parent=5 // pred_fallthru
        _
      %p1896 = scmp.le.s32.totalorder 2, %s20
      // Predicated region
      $region85: #{tpu_custom_call.1} parent=5 // pred_check
        %p1897 = pneg %p1896
      $region86: #{tpu_custom_call.1} parent=5 // pred_check_branch
        %1899 = sbr.rel (%p1897) target = $region88
      $region87: #{tpu_custom_call.1} parent=5 // pred_region
        %s1900 = ssub.s32 %s20, 2
        // Predicated region
        $region89: #{tpu_custom_call.1} parent=87 // pred_check
          %p1901 = pneg %p212
        $region90: #{tpu_custom_call.1} parent=87 // pred_check_branch
          %1903 = sbr.rel (%p1901) target = $region92
        $region91: #{tpu_custom_call.1} parent=87 // pred_region
          %s1904 = sand.u32 %s197, 1
          %s1905 = scalar_lea.sflag [#allocation8], %s1904
          %s1906 = sand.u32 %s197, 1
          %s1907 = smul.addr %s1906, 256
          %s1908 = scalar_lea.vmem [#allocation15], %s1907
          %1909 = dma.done %s1905, 4096
        $region92: #{tpu_custom_call.1} parent=87 // pred_fallthru
          _
      $region88: #{tpu_custom_call.1} parent=5 // pred_fallthru
        _
    $region6: #{tpu_custom_call.1} parent=1 // loop_footer
      %s24 = sadd.s32 1, %s20
    $region7: #{tpu_custom_call.1} parent=1 // loop_footer_branch
      %19 = sbr.rel target = $region3
    $region8: #{tpu_custom_call.1} parent=1 // loop_exit
      _
    %1910 = vsyncpa [#allocation7], 1
    %s1911 = scalar_lea.sflag [#allocation7], 1
    %1912 = vsyncpa %s1911, 1
    %1913 = vsyncpa [#allocation10], 1
    %1914 = vsyncpa [#allocation13], 1
    %1915 = vsyncpa [#allocation8], 1
    %s1916 = scalar_lea.sflag [#allocation8], 1
    %1917 = vsyncpa %s1916, 1
  %1918 = vsyncmov [#allocation5]
  %s1919 = vpop.sfrf %1918
  %p1920 = scmp.eq.s32.totalorder %s1919, 0
  %p1921 = pneg %p1920
  %1923 = shalt.err (%p1921)

</llo_original>
